<compile_context>
chip_gen: v5e
topology: v5e:2x2
jax: 0.10.0
libtpu: 0.0.40
codegen_flags: <defaults>
</compile_context>

<pallas_src>
import functools

import jax
import jax.numpy as jnp
from jax.experimental import pallas as pl
from jax.experimental.pallas import tpu as pltpu

NEG_BIG = 1e30
LANE = 128


def _round_up(v, m):
    return ((v + m - 1) // m) * m


def _pad2(a, rows, cols):
    return jnp.pad(a, ((0, rows - a.shape[0]), (0, cols - a.shape[1])))


def _full_spec(shape):
    nd = len(shape)
    return pl.BlockSpec(shape, lambda i, nd=nd: (0,) * nd)


# ---------------------------------------------------------------------------
# Fused Pallas kernel
# ---------------------------------------------------------------------------
def make_fused_gat_kernel(num_layers, f_pad):
    """Fused kernel: `num_layers` x (GATConv + ReLU) + final Linear."""

    def kernel(x_ref, adjb_ref, w_all_ref, b_all_ref, out_ref):
        h = x_ref[...]                                   # (Np, Fp) f32

        for l in range(num_layers):
            w_aug = w_all_ref[l]                         # (Fp, 2Fp) bf16
            # One MXU op: [xp | a_src | a_dst] = h @ [W | W@att_src^T | W@att_dst^T]
            xa = jnp.dot(h.astype(jnp.bfloat16), w_aug,
                         preferred_element_type=jnp.float32)    # (Np, 2Fp) f32
            xp = xa[:, :f_pad]                           # (Np, Fp) = x @ W
            a_src_col = xa[:, f_pad:f_pad + 1]           # (Np, 1) <xp_j, att_src>
            a_dst_col = xa[:, f_pad + 1:f_pad + 2]       # (Np, 1) <xp_i, att_dst>
            a_src_row = jnp.transpose(a_src_col)         # (1, Np) single XLU vxpose
            e = a_dst_col + a_src_row                    # e[i,j] = dst_i + src_j
            e = jnp.where(e > 0.0, e, 0.2 * e)           # LeakyReLU(0.2)
            # Additive mask re-read from VMEM each layer; bf16 storage, f32 math.
            e = e + adjb_ref[...].astype(jnp.float32)    # 0 on edge, -1e30 off edge
            e = e - jnp.max(e, axis=-1, keepdims=True)   # stable softmax
            p = jnp.exp(e)                               # masked entries underflow to 0
            denom = jnp.sum(p, axis=-1, keepdims=True)   # >= 1 (self loops)
            alpha = p * pl.reciprocal(denom, approx=True)
            h = jnp.dot(alpha.astype(jnp.bfloat16), xp.astype(jnp.bfloat16),
                        preferred_element_type=jnp.float32)
            h = jnp.maximum(h + b_all_ref[l:l + 1, :], 0.0)    # bias + fused ReLU

        # F.dropout(p=0.5, training=False) -> identity in eval mode.
        # Final Linear lives in slot `num_layers` of the slabs (weight cols [:Fp]).
        lin_w = w_all_ref[num_layers][:, :f_pad]          # (Fp, Fp) bf16
        out_ref[...] = (
            jnp.dot(h.astype(jnp.bfloat16), lin_w,
                    preferred_element_type=jnp.float32)
            + b_all_ref[num_layers:num_layers + 1, :]
        )

    return kernel


# ---------------------------------------------------------------------------
# Wrappers (glue)
# ---------------------------------------------------------------------------
def build_adj_bias(edge_index, num_nodes, n_pad):
    """Additive attention mask over the PADDED node set.

    0 where an edge src->dst (or a self loop) exists, -1e30 elsewhere.
    Self loops are also added on every padded row so padded rows softmax onto
    their own (zero) features and never produce NaNs/Infs.
    """
    # TODO(synk): dense mask collapses duplicate edges; PyG's edge-list softmax
    # would count a duplicated edge twice.  Synthetic edges assumed unique.
    del num_nodes
    src, dst = edge_index[0], edge_index[1]
    adj = jnp.zeros((n_pad, n_pad), jnp.float32)
    adj = adj.at[dst, src].set(1.0)
    diag = jnp.arange(n_pad)
    adj = adj.at[diag, diag].set(1.0)                 # add_self_loops=True
    return (adj - 1.0) * NEG_BIG


def gat_forward(params, x, adj_bias, num_nodes, num_classes):
    num_layers = len(params["gat_layers"])
    n_pad = adj_bias.shape[0]
    dims = [x.shape[1], params["lin_w"].shape[1]]
    dims += [layer["w"].shape[1] for layer in params["gat_layers"]]
    f_pad = _round_up(max(dims + [LANE]), LANE)

    # ---- Stack parameters into two slabs ------------------------------------
    # w_all[l] = [ W_l | W_l @ att_src_l^T | W_l @ att_dst_l^T | 0 ]  (Fp, 2Fp)
    # w_all[L] = [ lin_w | 0 ]
    # b_all[l] = bias_l (padded) ; b_all[L] = lin_b
    w_slabs, b_rows = [], []
    for layer in params["gat_layers"]:
        w = layer["w"]                                     # (Fin, Fout) f32
        col_src = (w @ layer["att_src"][0])[:, None]       # (Fin, 1) = W @ att_src^T
        col_dst = (w @ layer["att_dst"][0])[:, None]       # (Fin, 1) = W @ att_dst^T
        w_aug = jnp.concatenate(
            [_pad2(w, f_pad, f_pad),
             _pad2(col_src, f_pad, 1),
             _pad2(col_dst, f_pad, 1)], axis=1)
        w_slabs.append(_pad2(w_aug, f_pad, 2 * f_pad))
        b_rows.append(_pad2(layer["b"], 1, f_pad))
    w_slabs.append(_pad2(params["lin_w"], f_pad, 2 * f_pad))
    b_rows.append(_pad2(params["lin_b"], 1, f_pad))

    w_all = jnp.stack(w_slabs, axis=0).astype(jnp.bfloat16)        # (L+1, Fp, 2Fp)
    b_all = _pad2(jnp.concatenate(b_rows, axis=0),
                  _round_up(num_layers + 1, 8), f_pad)             # (8k, Fp) f32

    args = [
        _pad2(x, n_pad, f_pad),               # activations f32 (cast to bf16 at dot)
        adj_bias.astype(jnp.bfloat16),        # bf16 storage of the O(N^2) mask
        w_all,
        b_all,
    ]

    out_pad = pl.pallas_call(
        make_fused_gat_kernel(num_layers, f_pad),
        out_shape=jax.ShapeDtypeStruct((n_pad, f_pad), jnp.float32),
        grid=(1,),
        in_specs=[_full_spec(a.shape) for a in args],
        out_specs=_full_spec((n_pad, f_pad)),
        compiler_params=pltpu.CompilerParams(
            dimension_semantics=("arbitrary",),
            vmem_limit_bytes=32 * 1024 * 1024),
    )(*args)
    return out_pad[:num_nodes, :num_classes]


# ---------------------------------------------------------------------------
# Parameter init (Glorot, matching GATConv/Linear shapes)
# ---------------------------------------------------------------------------
def glorot(key, shape):
    fan_in, fan_out = shape[0], shape[-1]
    limit = jnp.sqrt(6.0 / (fan_in + fan_out))
    return jax.random.uniform(key, shape, jnp.float32, -limit, limit)


def init_params(key, num_features, hidden_channels_list, num_classes):
    hns = [num_features] + list(hidden_channels_list)
    layers = []
    for idx in range(len(hidden_channels_list)):
        key, kw, ks, kd = jax.random.split(key, 4)
        f_in, f_out = hns[idx], hns[idx + 1]
        layers.append(dict(
            w=glorot(kw, (f_in, f_out)),
            att_src=glorot(ks, (1, f_out)),
            att_dst=glorot(kd, (1, f_out)),
            b=jnp.zeros((1, f_out), jnp.float32),
        ))
    key, kw, kb = jax.random.split(key, 3)
    lin_w = glorot(kw, (hidden_channels_list[-1], num_classes))
    lin_b = jax.random.uniform(kb, (1, num_classes), jnp.float32, -0.1, 0.1)
    return dict(gat_layers=layers, lin_w=lin_w, lin_b=lin_b)


# ---------------------------------------------------------------------------
if __name__ == "__main__":
    N = 32                   # number of graph nodes
    NUM_FEATURES = 16
    HIDDEN = [32, 16]
    NUM_CLASSES = 8
    NUM_EDGES = 64

    key = jax.random.PRNGKey(0)
    k_x, k_src, k_dst, k_par = jax.random.split(key, 4)

    x = jax.random.normal(k_x, (N, NUM_FEATURES), jnp.float32)
    edge_index = jnp.stack([
        jax.random.randint(k_src, (NUM_EDGES,), 0, N),
        jax.random.randint(k_dst, (NUM_EDGES,), 0, N),
    ]).astype(jnp.int32)                       # (2, E), row0 = src, row1 = dst

    n_pad = _round_up(max(N, LANE), LANE)
    adj_bias = build_adj_bias(edge_index, N, n_pad)
    params = init_params(k_par, NUM_FEATURES, HIDDEN, NUM_CLASSES)

    fwd = jax.jit(functools.partial(gat_forward, num_nodes=N,
                                    num_classes=NUM_CLASSES))
    out = fwd(params, x, adj_bias)
    out = jax.block_until_ready(out)
    assert out.shape == (N, NUM_CLASSES)
    assert bool(jnp.all(jnp.isfinite(out)))
    print("KERNEL_OK")
</pallas_src>

<mosaic_0001>
module attributes {stable_mosaic.version = 11 : i64} {
  func.func @kernel(%arg0: i32, %arg1: memref<128x128xf32, #tpu.memory_space<vmem>>, %arg2: memref<128x128xbf16, #tpu.memory_space<vmem>>, %arg3: memref<3x128x256xbf16, #tpu.memory_space<vmem>>, %arg4: memref<8x128xf32, #tpu.memory_space<vmem>>, %arg5: memref<128x128xf32, #tpu.memory_space<vmem>>) attributes {dimension_semantics = [#tpu.dimension_semantics<arbitrary>], iteration_bounds = array<i64: 1>, scalar_prefetch = 0 : i64, scratch_operands = 0 : i64, tpu.core_type = #tpu.core_type<tc>, window_params = [{pipeline_mode = #tpu.pipeline_mode<synchronous>, transform_indices = @transform_0, window_bounds = array<i64: 128, 128>}, {pipeline_mode = #tpu.pipeline_mode<synchronous>, transform_indices = @transform_1, window_bounds = array<i64: 128, 128>}, {pipeline_mode = #tpu.pipeline_mode<synchronous>, transform_indices = @transform_2, window_bounds = array<i64: 3, 128, 256>}, {pipeline_mode = #tpu.pipeline_mode<synchronous>, transform_indices = @transform_3, window_bounds = array<i64: 8, 128>}, {pipeline_mode = #tpu.pipeline_mode<synchronous>, transform_indices = @transform_4, window_bounds = array<i64: 128, 128>}]} {
    %c0 = arith.constant 0 : index
    %c0_0 = arith.constant 0 : index
    %0 = vector.load %arg1[%c0, %c0_0] : memref<128x128xf32, #tpu.memory_space<vmem>>, vector<128x128xf32>
    %c0_1 = arith.constant 0 : index
    %c0_2 = arith.constant 0 : index
    %c0_3 = arith.constant 0 : index
    %1 = vector.load %arg3[%c0_1, %c0_2, %c0_3] : memref<3x128x256xbf16, #tpu.memory_space<vmem>>, vector<1x128x256xbf16>
    %2 = vector.shape_cast %1 : vector<1x128x256xbf16> to vector<128x256xbf16>
    %3 = arith.truncf %0 : vector<128x128xf32> to vector<128x128xbf16>
    %cst = arith.constant dense<0.000000e+00> : vector<128x256xf32>
    %4 = tpu.matmul %3, %2, %cst {dimension_numbers = #tpu.dot_dimension_numbers<[1], [0], [0], [1], [0, 0, 1, 1], [], []>} : vector<128x128xbf16>, vector<128x256xbf16>, vector<128x256xf32> -> vector<128x256xf32>
    %5 = vector.extract_strided_slice %4 {offsets = [0, 0], sizes = [128, 128], strides = [1, 1]} : vector<128x256xf32> to vector<128x128xf32>
    %6 = vector.extract_strided_slice %4 {offsets = [0, 128], sizes = [128, 1], strides = [1, 1]} : vector<128x256xf32> to vector<128x1xf32>
    %7 = vector.extract_strided_slice %4 {offsets = [0, 129], sizes = [128, 1], strides = [1, 1]} : vector<128x256xf32> to vector<128x1xf32>
    %8 = tpu.transpose %6, [1, 0] : vector<128x1xf32> -> vector<1x128xf32>
    %9 = vector.broadcast %7 : vector<128x1xf32> to vector<128x128xf32>
    %10 = vector.broadcast %8 : vector<1x128xf32> to vector<128x128xf32>
    %11 = arith.addf %9, %10 : vector<128x128xf32>
    %cst_4 = arith.constant 0.000000e+00 : f32
    %12 = vector.broadcast %cst_4 : f32 to vector<128x128xf32>
    %13 = arith.cmpf ogt, %11, %12 : vector<128x128xf32>
    %cst_5 = arith.constant 2.000000e-01 : f32
    %14 = vector.broadcast %cst_5 : f32 to vector<128x128xf32>
    %15 = arith.mulf %14, %11 : vector<128x128xf32>
    %16 = arith.select %13, %11, %15 : vector<128x128xi1>, vector<128x128xf32>
    %c0_6 = arith.constant 0 : index
    %c0_7 = arith.constant 0 : index
    %17 = vector.load %arg2[%c0_6, %c0_7] : memref<128x128xbf16, #tpu.memory_space<vmem>>, vector<128x128xbf16>
    %18 = arith.extf %17 : vector<128x128xbf16> to vector<128x128xf32>
    %19 = arith.addf %16, %18 : vector<128x128xf32>
    %cst_8 = arith.constant dense<0xFF800000> : vector<128xf32>
    %20 = vector.multi_reduction <maximumf>, %19, %cst_8 [1] : vector<128x128xf32> to vector<128xf32>
    %21 = vector.shape_cast %20 : vector<128xf32> to vector<128x1xf32>
    %22 = vector.broadcast %21 : vector<128x1xf32> to vector<128x128xf32>
    %23 = arith.subf %19, %22 : vector<128x128xf32>
    %24 = math.exp %23 : vector<128x128xf32>
    %cst_9 = arith.constant dense<0.000000e+00> : vector<128xf32>
    %25 = vector.multi_reduction <add>, %24, %cst_9 [1] : vector<128x128xf32> to vector<128xf32>
    %26 = vector.shape_cast %25 : vector<128xf32> to vector<128x1xf32>
    %27 = tpu.reciprocal %26 {approx = true} : vector<128x1xf32> -> vector<128x1xf32>
    %28 = vector.broadcast %27 : vector<128x1xf32> to vector<128x128xf32>
    %29 = arith.mulf %24, %28 : vector<128x128xf32>
    %30 = arith.truncf %29 : vector<128x128xf32> to vector<128x128xbf16>
    %31 = arith.truncf %5 : vector<128x128xf32> to vector<128x128xbf16>
    %cst_10 = arith.constant dense<0.000000e+00> : vector<128x128xf32>
    %32 = tpu.matmul %30, %31, %cst_10 {dimension_numbers = #tpu.dot_dimension_numbers<[1], [0], [0], [1], [0, 0, 1, 1], [], []>} : vector<128x128xbf16>, vector<128x128xbf16>, vector<128x128xf32> -> vector<128x128xf32>
    %c0_11 = arith.constant 0 : index
    %c0_12 = arith.constant 0 : index
    %33 = vector.load %arg4[%c0_11, %c0_12] : memref<8x128xf32, #tpu.memory_space<vmem>>, vector<1x128xf32>
    %34 = vector.broadcast %33 : vector<1x128xf32> to vector<128x128xf32>
    %35 = arith.addf %32, %34 : vector<128x128xf32>
    %cst_13 = arith.constant 0.000000e+00 : f32
    %36 = vector.broadcast %cst_13 : f32 to vector<128x128xf32>
    %37 = arith.maximumf %35, %36 : vector<128x128xf32>
    %c1 = arith.constant 1 : index
    %c0_14 = arith.constant 0 : index
    %c0_15 = arith.constant 0 : index
    %38 = vector.load %arg3[%c1, %c0_14, %c0_15] : memref<3x128x256xbf16, #tpu.memory_space<vmem>>, vector<1x128x256xbf16>
    %39 = vector.shape_cast %38 : vector<1x128x256xbf16> to vector<128x256xbf16>
    %40 = arith.truncf %37 : vector<128x128xf32> to vector<128x128xbf16>
    %cst_16 = arith.constant dense<0.000000e+00> : vector<128x256xf32>
    %41 = tpu.matmul %40, %39, %cst_16 {dimension_numbers = #tpu.dot_dimension_numbers<[1], [0], [0], [1], [0, 0, 1, 1], [], []>} : vector<128x128xbf16>, vector<128x256xbf16>, vector<128x256xf32> -> vector<128x256xf32>
    %42 = vector.extract_strided_slice %41 {offsets = [0, 0], sizes = [128, 128], strides = [1, 1]} : vector<128x256xf32> to vector<128x128xf32>
    %43 = vector.extract_strided_slice %41 {offsets = [0, 128], sizes = [128, 1], strides = [1, 1]} : vector<128x256xf32> to vector<128x1xf32>
    %44 = vector.extract_strided_slice %41 {offsets = [0, 129], sizes = [128, 1], strides = [1, 1]} : vector<128x256xf32> to vector<128x1xf32>
    %45 = tpu.transpose %43, [1, 0] : vector<128x1xf32> -> vector<1x128xf32>
    %46 = vector.broadcast %44 : vector<128x1xf32> to vector<128x128xf32>
    %47 = vector.broadcast %45 : vector<1x128xf32> to vector<128x128xf32>
    %48 = arith.addf %46, %47 : vector<128x128xf32>
    %cst_17 = arith.constant 0.000000e+00 : f32
    %49 = vector.broadcast %cst_17 : f32 to vector<128x128xf32>
    %50 = arith.cmpf ogt, %48, %49 : vector<128x128xf32>
    %cst_18 = arith.constant 2.000000e-01 : f32
    %51 = vector.broadcast %cst_18 : f32 to vector<128x128xf32>
    %52 = arith.mulf %51, %48 : vector<128x128xf32>
    %53 = arith.select %50, %48, %52 : vector<128x128xi1>, vector<128x128xf32>
    %c0_19 = arith.constant 0 : index
    %c0_20 = arith.constant 0 : index
    %54 = vector.load %arg2[%c0_19, %c0_20] : memref<128x128xbf16, #tpu.memory_space<vmem>>, vector<128x128xbf16>
    %55 = arith.extf %54 : vector<128x128xbf16> to vector<128x128xf32>
    %56 = arith.addf %53, %55 : vector<128x128xf32>
    %cst_21 = arith.constant dense<0xFF800000> : vector<128xf32>
    %57 = vector.multi_reduction <maximumf>, %56, %cst_21 [1] : vector<128x128xf32> to vector<128xf32>
    %58 = vector.shape_cast %57 : vector<128xf32> to vector<128x1xf32>
    %59 = vector.broadcast %58 : vector<128x1xf32> to vector<128x128xf32>
    %60 = arith.subf %56, %59 : vector<128x128xf32>
    %61 = math.exp %60 : vector<128x128xf32>
    %cst_22 = arith.constant dense<0.000000e+00> : vector<128xf32>
    %62 = vector.multi_reduction <add>, %61, %cst_22 [1] : vector<128x128xf32> to vector<128xf32>
    %63 = vector.shape_cast %62 : vector<128xf32> to vector<128x1xf32>
    %64 = tpu.reciprocal %63 {approx = true} : vector<128x1xf32> -> vector<128x1xf32>
    %65 = vector.broadcast %64 : vector<128x1xf32> to vector<128x128xf32>
    %66 = arith.mulf %61, %65 : vector<128x128xf32>
    %67 = arith.truncf %66 : vector<128x128xf32> to vector<128x128xbf16>
    %68 = arith.truncf %42 : vector<128x128xf32> to vector<128x128xbf16>
    %cst_23 = arith.constant dense<0.000000e+00> : vector<128x128xf32>
    %69 = tpu.matmul %67, %68, %cst_23 {dimension_numbers = #tpu.dot_dimension_numbers<[1], [0], [0], [1], [0, 0, 1, 1], [], []>} : vector<128x128xbf16>, vector<128x128xbf16>, vector<128x128xf32> -> vector<128x128xf32>
    %c1_24 = arith.constant 1 : index
    %c0_25 = arith.constant 0 : index
    %70 = vector.load %arg4[%c1_24, %c0_25] : memref<8x128xf32, #tpu.memory_space<vmem>>, vector<1x128xf32>
    %71 = vector.broadcast %70 : vector<1x128xf32> to vector<128x128xf32>
    %72 = arith.addf %69, %71 : vector<128x128xf32>
    %cst_26 = arith.constant 0.000000e+00 : f32
    %73 = vector.broadcast %cst_26 : f32 to vector<128x128xf32>
    %74 = arith.maximumf %72, %73 : vector<128x128xf32>
    %c2 = arith.constant 2 : index
    %c0_27 = arith.constant 0 : index
    %c0_28 = arith.constant 0 : index
    %75 = vector.load %arg3[%c2, %c0_27, %c0_28] : memref<3x128x256xbf16, #tpu.memory_space<vmem>>, vector<1x128x256xbf16>
    %76 = vector.shape_cast %75 : vector<1x128x256xbf16> to vector<128x256xbf16>
    %77 = vector.extract_strided_slice %76 {offsets = [0, 0], sizes = [128, 128], strides = [1, 1]} : vector<128x256xbf16> to vector<128x128xbf16>
    %78 = arith.truncf %74 : vector<128x128xf32> to vector<128x128xbf16>
    %cst_29 = arith.constant dense<0.000000e+00> : vector<128x128xf32>
    %79 = tpu.matmul %78, %77, %cst_29 {dimension_numbers = #tpu.dot_dimension_numbers<[1], [0], [0], [1], [0, 0, 1, 1], [], []>} : vector<128x128xbf16>, vector<128x128xbf16>, vector<128x128xf32> -> vector<128x128xf32>
    %c2_30 = arith.constant 2 : index
    %c0_31 = arith.constant 0 : index
    %80 = vector.load %arg4[%c2_30, %c0_31] : memref<8x128xf32, #tpu.memory_space<vmem>>, vector<1x128xf32>
    %81 = vector.broadcast %80 : vector<1x128xf32> to vector<128x128xf32>
    %82 = arith.addf %79, %81 : vector<128x128xf32>
    %c0_32 = arith.constant 0 : index
    %c0_33 = arith.constant 0 : index
    %83 = vector.load %arg5[%c0_32, %c0_33] : memref<128x128xf32, #tpu.memory_space<vmem>>, vector<128x128xf32>
    tpu.vector_store %arg5[%c0_32, %c0_33], %82 {strides = array<i32>} : memref<128x128xf32, #tpu.memory_space<vmem>>, vector<128x128xf32>,
    return
  }
  func.func @transform_0(%arg0: i32) -> (i32, i32) {
    %c0_i32 = arith.constant 0 : i32
    %c0_i32_0 = arith.constant 0 : i32
    %c0_i32_1 = arith.constant 0 : i32
    return %c0_i32, %c0_i32_0 : i32, i32
  }
  func.func @transform_1(%arg0: i32) -> (i32, i32) {
    %c0_i32 = arith.constant 0 : i32
    %c0_i32_0 = arith.constant 0 : i32
    %c0_i32_1 = arith.constant 0 : i32
    return %c0_i32, %c0_i32_0 : i32, i32
  }
  func.func @transform_2(%arg0: i32) -> (i32, i32, i32) {
    %c0_i32 = arith.constant 0 : i32
    %c0_i32_0 = arith.constant 0 : i32
    %c0_i32_1 = arith.constant 0 : i32
    %c0_i32_2 = arith.constant 0 : i32
    return %c0_i32, %c0_i32_0, %c0_i32_1 : i32, i32, i32
  }
  func.func @transform_3(%arg0: i32) -> (i32, i32) {
    %c0_i32 = arith.constant 0 : i32
    %c0_i32_0 = arith.constant 0 : i32
    %c0_i32_1 = arith.constant 0 : i32
    return %c0_i32, %c0_i32_0 : i32, i32
  }
  func.func @transform_4(%arg0: i32) -> (i32, i32) {
    %c0_i32 = arith.constant 0 : i32
    %c0_i32_0 = arith.constant 0 : i32
    %c0_i32_1 = arith.constant 0 : i32
    return %c0_i32, %c0_i32_0 : i32, i32
  }
}

</mosaic_0001>

<llo_original>
// kernel: gat_forward.1
$region0: #{gat_forward.1}
  #allocation0 [shape = 'u32[]', space=smem, size = 0x4, offset = 0x4, fixed_abs, tag = 'smem constant byte address 0x4 - core index']
  #allocation1 [shape = 'u32[72,128]{1,0:T(1,128)}', space=vmem, size = 0x9000, scoped, tag = 'internal scratch']
  %s0 = inlined_call_operand.vmem [shape: f32[128,128], index: 0, kind: input, shape index: {}]
  %s1 = inlined_call_operand.vmem [shape: bf16[128,128], index: 1, kind: input, shape index: {}]
  %s2 = inlined_call_operand.vmem [shape: bf16[3,128,256], index: 2, kind: input, shape index: {}]
  %s3 = inlined_call_operand.vmem [shape: f32[8,128], index: 3, kind: input, shape index: {}]
  %s4 = inlined_call_operand.vmem [shape: f32[128,128], index: 4, kind: output, shape index: {}]
  %s5 = sld [smem:[#allocation0]]
  $region26: #{gat_forward.1} parent=0
    _
  %s7 = ssub.s32 1, %s5
  %s8 = scalar_select 0, %s7, %s5
  // Predicated region
  $region2: #{gat_forward.1} parent=0 // pred_check
    _
  $region3: #{gat_forward.1} parent=0 // pred_check_branch
    %10 = sbr.rel (0) target = $region5
  $region4: #{gat_forward.1} parent=0 // pred_region
    _
  $region5: #{gat_forward.1} parent=0 // pred_fallthru
    _
  // Predicated region
  $region6: #{gat_forward.1} parent=0 // pred_check
    _
  $region7: #{gat_forward.1} parent=0 // pred_check_branch
    %12 = sbr.rel (0) target = $region9
  $region8: #{gat_forward.1} parent=0 // pred_region
    _
  $region9: #{gat_forward.1} parent=0 // pred_fallthru
    _
  // Predicated region
  $region10: #{gat_forward.1} parent=0 // pred_check
    _
  $region11: #{gat_forward.1} parent=0 // pred_check_branch
    %14 = sbr.rel (0) target = $region13
  $region12: #{gat_forward.1} parent=0 // pred_region
    _
  $region13: #{gat_forward.1} parent=0 // pred_fallthru
    _
  // Predicated region
  $region14: #{gat_forward.1} parent=0 // pred_check
    _
  $region15: #{gat_forward.1} parent=0 // pred_check_branch
    %16 = sbr.rel (0) target = $region17
  $region16: #{gat_forward.1} parent=0 // pred_region
    _
  $region17: #{gat_forward.1} parent=0 // pred_fallthru
    _
  %v17 = vld [vmem:[%s0] sm:$0xff]
  %v18 = vld [vmem:[%s0 + $0x8] sm:$0xff]
  %v19 = vld [vmem:[%s0 + $0x10] sm:$0xff]
  %v20 = vld [vmem:[%s0 + $0x18] sm:$0xff]
  %v21 = vld [vmem:[%s0 + $0x20] sm:$0xff]
  %v22 = vld [vmem:[%s0 + $0x28] sm:$0xff]
  %v23 = vld [vmem:[%s0 + $0x30] sm:$0xff]
  %v24 = vld [vmem:[%s0 + $0x38] sm:$0xff]
  %v25 = vld [vmem:[%s0 + $0x40] sm:$0xff]
  %v26 = vld [vmem:[%s0 + $0x48] sm:$0xff]
  %v27 = vld [vmem:[%s0 + $0x50] sm:$0xff]
  %v28 = vld [vmem:[%s0 + $0x58] sm:$0xff]
  %v29 = vld [vmem:[%s0 + $0x60] sm:$0xff]
  %v30 = vld [vmem:[%s0 + $0x68] sm:$0xff]
  %v31 = vld [vmem:[%s0 + $0x70] sm:$0xff]
  %v32 = vld [vmem:[%s0 + $0x78] sm:$0xff]
  %v33 = vld [vmem:[%s2] sm:$0xff]
  %v34 = vld [vmem:[%s2 + $0x8] sm:$0xff]
  %v35 = vld [vmem:[%s2 + $0x10] sm:$0xff]
  %v36 = vld [vmem:[%s2 + $0x18] sm:$0xff]
  %v37 = vld [vmem:[%s2 + $0x20] sm:$0xff]
  %v38 = vld [vmem:[%s2 + $0x28] sm:$0xff]
  %v39 = vld [vmem:[%s2 + $0x30] sm:$0xff]
  %v40 = vld [vmem:[%s2 + $0x38] sm:$0xff]
  %v41 = vld [vmem:[%s2 + $0x40] sm:$0xff]
  %v42 = vld [vmem:[%s2 + $0x48] sm:$0xff]
  %v43 = vld [vmem:[%s2 + $0x50] sm:$0xff]
  %v44 = vld [vmem:[%s2 + $0x58] sm:$0xff]
  %v45 = vld [vmem:[%s2 + $0x60] sm:$0xff]
  %v46 = vld [vmem:[%s2 + $0x68] sm:$0xff]
  %v47 = vld [vmem:[%s2 + $0x70] sm:$0xff]
  %v48 = vld [vmem:[%s2 + $0x78] sm:$0xff]
  %v49 = vpack.c.bf16 %v18, %v17
  %v50 = vpack.c.bf16 %v20, %v19
  %v51 = vpack.c.bf16 %v22, %v21
  %v52 = vpack.c.bf16 %v24, %v23
  %v53 = vpack.c.bf16 %v26, %v25
  %v54 = vpack.c.bf16 %v28, %v27
  %v55 = vpack.c.bf16 %v30, %v29
  %v56 = vpack.c.bf16 %v32, %v31
  %v73 = vunpack.c.l.b16 %v33
  %v74 = vunpack.c.h.b16 %v33
  %v75 = vunpack.c.l.b16 %v34
  %v76 = vunpack.c.h.b16 %v34
  %v77 = vunpack.c.l.b16 %v35
  %v78 = vunpack.c.h.b16 %v35
  %v79 = vunpack.c.l.b16 %v36
  %v80 = vunpack.c.h.b16 %v36
  %v81 = vunpack.c.l.b16 %v37
  %v82 = vunpack.c.h.b16 %v37
  %v83 = vunpack.c.l.b16 %v38
  %v84 = vunpack.c.h.b16 %v38
  %v85 = vunpack.c.l.b16 %v39
  %v86 = vunpack.c.h.b16 %v39
  %v87 = vunpack.c.l.b16 %v40
  %v88 = vunpack.c.h.b16 %v40
  %v89 = vunpack.c.l.b16 %v41
  %v90 = vunpack.c.h.b16 %v41
  %v91 = vunpack.c.l.b16 %v42
  %v92 = vunpack.c.h.b16 %v42
  %v93 = vunpack.c.l.b16 %v43
  %v94 = vunpack.c.h.b16 %v43
  %v95 = vunpack.c.l.b16 %v44
  %v96 = vunpack.c.h.b16 %v44
  %v97 = vunpack.c.l.b16 %v45
  %v98 = vunpack.c.h.b16 %v45
  %v99 = vunpack.c.l.b16 %v46
  %v100 = vunpack.c.h.b16 %v46
  %v101 = vunpack.c.l.b16 %v47
  %v102 = vunpack.c.h.b16 %v47
  %v103 = vunpack.c.l.b16 %v48
  %v104 = vunpack.c.h.b16 %v48
  %v105 = vpack.c.b16 %v75, %v73
  %v106 = vpack.c.b16 %v76, %v74
  %v107 = vpack.c.b16 %v79, %v77
  %v108 = vpack.c.b16 %v80, %v78
  %v109 = vpack.c.b16 %v83, %v81
  %v110 = vpack.c.b16 %v84, %v82
  %v111 = vpack.c.b16 %v87, %v85
  %v112 = vpack.c.b16 %v88, %v86
  %v113 = vpack.c.b16 %v91, %v89
  %v114 = vpack.c.b16 %v92, %v90
  %v115 = vpack.c.b16 %v95, %v93
  %v116 = vpack.c.b16 %v96, %v94
  %v117 = vpack.c.b16 %v99, %v97
  %v118 = vpack.c.b16 %v100, %v98
  %v119 = vpack.c.b16 %v103, %v101
  %v120 = vpack.c.b16 %v104, %v102
  %137 = vmatpush.bf16.msra.mxu0 %v119
  %138 = vmatpush.bf16.msra.mxu0 %v117
  %139 = vmatpush.bf16.msra.mxu0 %v115
  %140 = vmatpush.bf16.msra.mxu0 %v113
  %141 = vmatpush.bf16.msra.mxu0 %v111
  %142 = vmatpush.bf16.msra.mxu0 %v109
  %143 = vmatpush.bf16.msra.mxu0 %v107
  %144 = vmatpush.bf16.msra.mxu0 %v105
  %145 = vmatmul.bf16.gmra.mxu0 %v49
  %v146 = vpop.f32.mrf.mxu0
  %v147 = vadd.f32 0.0, %v146
  %v148 = vpop.f32.mrf.mxu0
  %v149 = vadd.f32 0.0, %v148
  %150 = vmatmul.bf16.gmra.mxu0 %v50
  %v151 = vpop.f32.mrf.mxu0
  %v152 = vadd.f32 0.0, %v151
  %v153 = vpop.f32.mrf.mxu0
  %v154 = vadd.f32 0.0, %v153
  %155 = vmatmul.bf16.gmra.mxu0 %v51
  %v156 = vpop.f32.mrf.mxu0
  %v157 = vadd.f32 0.0, %v156
  %v158 = vpop.f32.mrf.mxu0
  %v159 = vadd.f32 0.0, %v158
  %160 = vmatmul.bf16.gmra.mxu0 %v52
  %v161 = vpop.f32.mrf.mxu0
  %v162 = vadd.f32 0.0, %v161
  %v163 = vpop.f32.mrf.mxu0
  %v164 = vadd.f32 0.0, %v163
  %165 = vmatmul.bf16.gmra.mxu0 %v53
  %v166 = vpop.f32.mrf.mxu0
  %v167 = vadd.f32 0.0, %v166
  %v168 = vpop.f32.mrf.mxu0
  %v169 = vadd.f32 0.0, %v168
  %170 = vmatmul.bf16.gmra.mxu0 %v54
  %v171 = vpop.f32.mrf.mxu0
  %v172 = vadd.f32 0.0, %v171
  %v173 = vpop.f32.mrf.mxu0
  %v174 = vadd.f32 0.0, %v173
  %175 = vmatmul.bf16.gmra.mxu0 %v55
  %v176 = vpop.f32.mrf.mxu0
  %v177 = vadd.f32 0.0, %v176
  %v178 = vpop.f32.mrf.mxu0
  %v179 = vadd.f32 0.0, %v178
  %180 = vmatmul.bf16.gmra.mxu0 %v56
  %v181 = vpop.f32.mrf.mxu0
  %v182 = vadd.f32 0.0, %v181
  %v183 = vpop.f32.mrf.mxu0
  %v184 = vadd.f32 0.0, %v183
  %185 = vdwg.mxu0
  %186 = vmatpush.bf16.msra.mxu0 %v120
  %187 = vmatpush.bf16.msra.mxu0 %v118
  %188 = vmatpush.bf16.msra.mxu0 %v116
  %189 = vmatpush.bf16.msra.mxu0 %v114
  %190 = vmatpush.bf16.msra.mxu0 %v112
  %191 = vmatpush.bf16.msra.mxu0 %v110
  %192 = vmatpush.bf16.msra.mxu0 %v108
  %193 = vmatpush.bf16.msra.mxu0 %v106
  %194 = vmatmul.bf16.gmra.mxu0 %v49
  %v195 = vpop.f32.mrf.mxu0
  %v196 = vadd.f32 0.0, %v195
  %v197 = vpop.f32.mrf.mxu0
  %v198 = vadd.f32 0.0, %v197
  %199 = vmatmul.bf16.gmra.mxu0 %v50
  %v200 = vpop.f32.mrf.mxu0
  %v201 = vadd.f32 0.0, %v200
  %v202 = vpop.f32.mrf.mxu0
  %v203 = vadd.f32 0.0, %v202
  %204 = vmatmul.bf16.gmra.mxu0 %v51
  %v205 = vpop.f32.mrf.mxu0
  %v206 = vadd.f32 0.0, %v205
  %v207 = vpop.f32.mrf.mxu0
  %v208 = vadd.f32 0.0, %v207
  %209 = vmatmul.bf16.gmra.mxu0 %v52
  %v210 = vpop.f32.mrf.mxu0
  %v211 = vadd.f32 0.0, %v210
  %v212 = vpop.f32.mrf.mxu0
  %v213 = vadd.f32 0.0, %v212
  %214 = vmatmul.bf16.gmra.mxu0 %v53
  %v215 = vpop.f32.mrf.mxu0
  %v216 = vadd.f32 0.0, %v215
  %v217 = vpop.f32.mrf.mxu0
  %v218 = vadd.f32 0.0, %v217
  %219 = vmatmul.bf16.gmra.mxu0 %v54
  %v220 = vpop.f32.mrf.mxu0
  %v221 = vadd.f32 0.0, %v220
  %v222 = vpop.f32.mrf.mxu0
  %v223 = vadd.f32 0.0, %v222
  %224 = vmatmul.bf16.gmra.mxu0 %v55
  %v225 = vpop.f32.mrf.mxu0
  %v226 = vadd.f32 0.0, %v225
  %v227 = vpop.f32.mrf.mxu0
  %v228 = vadd.f32 0.0, %v227
  %229 = vmatmul.bf16.gmra.mxu0 %v56
  %v230 = vpop.f32.mrf.mxu0
  %v231 = vadd.f32 0.0, %v230
  %v232 = vpop.f32.mrf.mxu0
  %v233 = vadd.f32 0.0, %v232
  %234 = vdwg.mxu0
  %235 = vxpose.xlu0.b32.start [1/16] %v196, 128
  %236 = vxpose.xlu0.b32.cont [2/16] %v198, 128
  %237 = vxpose.xlu0.b32.cont [3/16] %v201, 128
  %238 = vxpose.xlu0.b32.cont [4/16] %v203, 128
  %239 = vxpose.xlu0.b32.cont [5/16] %v206, 128
  %240 = vxpose.xlu0.b32.cont [6/16] %v208, 128
  %241 = vxpose.xlu0.b32.cont [7/16] %v211, 128
  %242 = vxpose.xlu0.b32.cont [8/16] %v213, 128
  %243 = vxpose.xlu0.b32.cont [9/16] %v216, 128
  %244 = vxpose.xlu0.b32.cont [10/16] %v218, 128
  %245 = vxpose.xlu0.b32.cont [11/16] %v221, 128
  %246 = vxpose.xlu0.b32.cont [12/16] %v223, 128
  %247 = vxpose.xlu0.b32.cont [13/16] %v226, 128
  %248 = vxpose.xlu0.b32.cont [14/16] %v228, 128
  %249 = vxpose.xlu0.b32.cont [15/16] %v231, 128
  %250 = vxpose.xlu0.b32.end [16/16] %v233, 128
  %v251 = vpop.trf.xlu0
  %v252 = vpop.trf.xlu0
  %v253 = vpop.trf.xlu0
  %v254 = vpop.trf.xlu0
  %v255 = vpop.trf.xlu0
  %v256 = vpop.trf.xlu0
  %v257 = vpop.trf.xlu0
  %v258 = vpop.trf.xlu0
  %v259 = vpop.trf.xlu0
  %v260 = vpop.trf.xlu0
  %v261 = vpop.trf.xlu0
  %v262 = vpop.trf.xlu0
  %v263 = vpop.trf.xlu0
  %v264 = vpop.trf.xlu0
  %v265 = vpop.trf.xlu0
  %v266 = vpop.trf.xlu0
  %268 = vset.pattern.permute.xlu0 1
  %269 = vperm.xlu0 %268, %v196
  %v270 = vpop.permute.xlu0 %269
  %273 = vset.pattern.permute.xlu0 1
  %274 = vperm.xlu0 %273, %v198
  %v275 = vpop.permute.xlu0 %274
  %278 = vset.pattern.permute.xlu0 1
  %279 = vperm.xlu0 %278, %v201
  %v280 = vpop.permute.xlu0 %279
  %283 = vset.pattern.permute.xlu0 1
  %284 = vperm.xlu0 %283, %v203
  %v285 = vpop.permute.xlu0 %284
  %288 = vset.pattern.permute.xlu0 1
  %289 = vperm.xlu0 %288, %v206
  %v290 = vpop.permute.xlu0 %289
  %293 = vset.pattern.permute.xlu0 1
  %294 = vperm.xlu0 %293, %v208
  %v295 = vpop.permute.xlu0 %294
  %298 = vset.pattern.permute.xlu0 1
  %299 = vperm.xlu0 %298, %v211
  %v300 = vpop.permute.xlu0 %299
  %303 = vset.pattern.permute.xlu0 1
  %304 = vperm.xlu0 %303, %v213
  %v305 = vpop.permute.xlu0 %304
  %308 = vset.pattern.permute.xlu0 1
  %309 = vperm.xlu0 %308, %v216
  %v310 = vpop.permute.xlu0 %309
  %313 = vset.pattern.permute.xlu0 1
  %314 = vperm.xlu0 %313, %v218
  %v315 = vpop.permute.xlu0 %314
  %318 = vset.pattern.permute.xlu0 1
  %319 = vperm.xlu0 %318, %v221
  %v320 = vpop.permute.xlu0 %319
  %323 = vset.pattern.permute.xlu0 1
  %324 = vperm.xlu0 %323, %v223
  %v325 = vpop.permute.xlu0 %324
  %328 = vset.pattern.permute.xlu0 1
  %329 = vperm.xlu0 %328, %v226
  %v330 = vpop.permute.xlu0 %329
  %333 = vset.pattern.permute.xlu0 1
  %334 = vperm.xlu0 %333, %v228
  %v335 = vpop.permute.xlu0 %334
  %338 = vset.pattern.permute.xlu0 1
  %339 = vperm.xlu0 %338, %v231
  %v340 = vpop.permute.xlu0 %339
  %343 = vset.pattern.permute.xlu0 1
  %344 = vperm.xlu0 %343, %v233
  %v345 = vpop.permute.xlu0 %344
  %v347 = vperm.slane %v251, 0
  %v348 = vadd.f32 %v270, %v347
  %v349 = vadd.f32 %v275, %v347
  %v350 = vadd.f32 %v280, %v347
  %v351 = vadd.f32 %v285, %v347
  %v352 = vadd.f32 %v290, %v347
  %v353 = vadd.f32 %v295, %v347
  %v354 = vadd.f32 %v300, %v347
  %v355 = vadd.f32 %v305, %v347
  %v356 = vadd.f32 %v310, %v347
  %v357 = vadd.f32 %v315, %v347
  %v358 = vadd.f32 %v320, %v347
  %v359 = vadd.f32 %v325, %v347
  %v360 = vadd.f32 %v330, %v347
  %v361 = vadd.f32 %v335, %v347
  %v362 = vadd.f32 %v340, %v347
  %v363 = vadd.f32 %v345, %v347
  %vm364 = vcmp.gt.f32.partialorder %v348, 0.0
  %vm365 = vcmp.gt.f32.partialorder %v349, 0.0
  %vm366 = vcmp.gt.f32.partialorder %v350, 0.0
  %vm367 = vcmp.gt.f32.partialorder %v351, 0.0
  %vm368 = vcmp.gt.f32.partialorder %v352, 0.0
  %vm369 = vcmp.gt.f32.partialorder %v353, 0.0
  %vm370 = vcmp.gt.f32.partialorder %v354, 0.0
  %vm371 = vcmp.gt.f32.partialorder %v355, 0.0
  %vm372 = vcmp.gt.f32.partialorder %v356, 0.0
  %vm373 = vcmp.gt.f32.partialorder %v357, 0.0
  %vm374 = vcmp.gt.f32.partialorder %v358, 0.0
  %vm375 = vcmp.gt.f32.partialorder %v359, 0.0
  %vm376 = vcmp.gt.f32.partialorder %v360, 0.0
  %vm377 = vcmp.gt.f32.partialorder %v361, 0.0
  %vm378 = vcmp.gt.f32.partialorder %v362, 0.0
  %vm379 = vcmp.gt.f32.partialorder %v363, 0.0
  %v380 = vmul.f32 %v348, 0.2
  %v381 = vmul.f32 %v349, 0.2
  %v382 = vmul.f32 %v350, 0.2
  %v383 = vmul.f32 %v351, 0.2
  %v384 = vmul.f32 %v352, 0.2
  %v385 = vmul.f32 %v353, 0.2
  %v386 = vmul.f32 %v354, 0.2
  %v387 = vmul.f32 %v355, 0.2
  %v388 = vmul.f32 %v356, 0.2
  %v389 = vmul.f32 %v357, 0.2
  %v390 = vmul.f32 %v358, 0.2
  %v391 = vmul.f32 %v359, 0.2
  %v392 = vmul.f32 %v360, 0.2
  %v393 = vmul.f32 %v361, 0.2
  %v394 = vmul.f32 %v362, 0.2
  %v395 = vmul.f32 %v363, 0.2
  %v396 = vsel %vm364, %v348, %v380
  %v397 = vsel %vm365, %v349, %v381
  %v398 = vsel %vm366, %v350, %v382
  %v399 = vsel %vm367, %v351, %v383
  %v400 = vsel %vm368, %v352, %v384
  %v401 = vsel %vm369, %v353, %v385
  %v402 = vsel %vm370, %v354, %v386
  %v403 = vsel %vm371, %v355, %v387
  %v404 = vsel %vm372, %v356, %v388
  %v405 = vsel %vm373, %v357, %v389
  %v406 = vsel %vm374, %v358, %v390
  %v407 = vsel %vm375, %v359, %v391
  %v408 = vsel %vm376, %v360, %v392
  %v409 = vsel %vm377, %v361, %v393
  %v410 = vsel %vm378, %v362, %v394
  %v411 = vsel %vm379, %v363, %v395
  %v412 = vld [vmem:[%s1] sm:$0xf]
  %v413 = vld [vmem:[%s1 + $0x4] sm:$0xf]
  %v414 = vld [vmem:[%s1 + $0x8] sm:$0xf]
  %v415 = vld [vmem:[%s1 + $0xc] sm:$0xf]
  %v416 = vld [vmem:[%s1 + $0x10] sm:$0xf]
  %v417 = vld [vmem:[%s1 + $0x14] sm:$0xf]
  %v418 = vld [vmem:[%s1 + $0x18] sm:$0xf]
  %v419 = vld [vmem:[%s1 + $0x1c] sm:$0xf]
  %v420 = vld [vmem:[%s1 + $0x20] sm:$0xf]
  %v421 = vld [vmem:[%s1 + $0x24] sm:$0xf]
  %v422 = vld [vmem:[%s1 + $0x28] sm:$0xf]
  %v423 = vld [vmem:[%s1 + $0x2c] sm:$0xf]
  %v424 = vld [vmem:[%s1 + $0x30] sm:$0xf]
  %v425 = vld [vmem:[%s1 + $0x34] sm:$0xf]
  %v426 = vld [vmem:[%s1 + $0x38] sm:$0xf]
  %v427 = vld [vmem:[%s1 + $0x3c] sm:$0xf]
  %v428 = vunpack.c.l.bf16 %v412
  %v429 = vunpack.c.l.bf16 %v413
  %v430 = vunpack.c.l.bf16 %v414
  %v431 = vunpack.c.l.bf16 %v415
  %v432 = vunpack.c.l.bf16 %v416
  %v433 = vunpack.c.l.bf16 %v417
  %v434 = vunpack.c.l.bf16 %v418
  %v435 = vunpack.c.l.bf16 %v419
  %v436 = vunpack.c.l.bf16 %v420
  %v437 = vunpack.c.l.bf16 %v421
  %v438 = vunpack.c.l.bf16 %v422
  %v439 = vunpack.c.l.bf16 %v423
  %v440 = vunpack.c.l.bf16 %v424
  %v441 = vunpack.c.l.bf16 %v425
  %v442 = vunpack.c.l.bf16 %v426
  %v443 = vunpack.c.l.bf16 %v427
  %v444 = vadd.f32 %v396, %v428
  %v445 = vadd.f32 %v397, %v429
  %v446 = vadd.f32 %v398, %v430
  %v447 = vadd.f32 %v399, %v431
  %v448 = vadd.f32 %v400, %v432
  %v449 = vadd.f32 %v401, %v433
  %v450 = vadd.f32 %v402, %v434
  %v451 = vadd.f32 %v403, %v435
  %v452 = vadd.f32 %v404, %v436
  %v453 = vadd.f32 %v405, %v437
  %v454 = vadd.f32 %v406, %v438
  %v455 = vadd.f32 %v407, %v439
  %v456 = vadd.f32 %v408, %v440
  %v457 = vadd.f32 %v409, %v441
  %v458 = vadd.f32 %v410, %v442
  %v459 = vadd.f32 %v411, %v443
  %460 = vmax.xlane.f32.xlu0 %v444
  %v461 = vpop.xlane.xlu0 %460
  %462 = vmax.xlane.f32.xlu0 %v445
  %v463 = vpop.xlane.xlu0 %462
  %464 = vmax.xlane.f32.xlu0 %v446
  %v465 = vpop.xlane.xlu0 %464
  %466 = vmax.xlane.f32.xlu0 %v447
  %v467 = vpop.xlane.xlu0 %466
  %468 = vmax.xlane.f32.xlu0 %v448
  %v469 = vpop.xlane.xlu0 %468
  %470 = vmax.xlane.f32.xlu0 %v449
  %v471 = vpop.xlane.xlu0 %470
  %472 = vmax.xlane.f32.xlu0 %v450
  %v473 = vpop.xlane.xlu0 %472
  %474 = vmax.xlane.f32.xlu0 %v451
  %v475 = vpop.xlane.xlu0 %474
  %476 = vmax.xlane.f32.xlu0 %v452
  %v477 = vpop.xlane.xlu0 %476
  %478 = vmax.xlane.f32.xlu0 %v453
  %v479 = vpop.xlane.xlu0 %478
  %480 = vmax.xlane.f32.xlu0 %v454
  %v481 = vpop.xlane.xlu0 %480
  %482 = vmax.xlane.f32.xlu0 %v455
  %v483 = vpop.xlane.xlu0 %482
  %484 = vmax.xlane.f32.xlu0 %v456
  %v485 = vpop.xlane.xlu0 %484
  %486 = vmax.xlane.f32.xlu0 %v457
  %v487 = vpop.xlane.xlu0 %486
  %488 = vmax.xlane.f32.xlu0 %v458
  %v489 = vpop.xlane.xlu0 %488
  %490 = vmax.xlane.f32.xlu0 %v459
  %v491 = vpop.xlane.xlu0 %490
  %v492 = vsub.f32 %v444, %v461
  %v493 = vsub.f32 %v445, %v463
  %v494 = vsub.f32 %v446, %v465
  %v495 = vsub.f32 %v447, %v467
  %v496 = vsub.f32 %v448, %v469
  %v497 = vsub.f32 %v449, %v471
  %v498 = vsub.f32 %v450, %v473
  %v499 = vsub.f32 %v451, %v475
  %v500 = vsub.f32 %v452, %v477
  %v501 = vsub.f32 %v453, %v479
  %v502 = vsub.f32 %v454, %v481
  %v503 = vsub.f32 %v455, %v483
  %v504 = vsub.f32 %v456, %v485
  %v505 = vsub.f32 %v457, %v487
  %v506 = vsub.f32 %v458, %v489
  %v507 = vsub.f32 %v459, %v491
  %v508 = vmul.f32 %v492, 1.442695
  %v509 = vpow.pop %v508
  %v510 = vmul.f32 %v493, 1.442695
  %v511 = vpow.pop %v510
  %v512 = vmul.f32 %v494, 1.442695
  %v513 = vpow.pop %v512
  %v514 = vmul.f32 %v495, 1.442695
  %v515 = vpow.pop %v514
  %v516 = vmul.f32 %v496, 1.442695
  %v517 = vpow.pop %v516
  %v518 = vmul.f32 %v497, 1.442695
  %v519 = vpow.pop %v518
  %v520 = vmul.f32 %v498, 1.442695
  %v521 = vpow.pop %v520
  %v522 = vmul.f32 %v499, 1.442695
  %v523 = vpow.pop %v522
  %v524 = vmul.f32 %v500, 1.442695
  %v525 = vpow.pop %v524
  %v526 = vmul.f32 %v501, 1.442695
  %v527 = vpow.pop %v526
  %v528 = vmul.f32 %v502, 1.442695
  %v529 = vpow.pop %v528
  %v530 = vmul.f32 %v503, 1.442695
  %v531 = vpow.pop %v530
  %v532 = vmul.f32 %v504, 1.442695
  %v533 = vpow.pop %v532
  %v534 = vmul.f32 %v505, 1.442695
  %v535 = vpow.pop %v534
  %v536 = vmul.f32 %v506, 1.442695
  %v537 = vpow.pop %v536
  %v538 = vmul.f32 %v507, 1.442695
  %v539 = vpow.pop %v538
  %540 = vadd.xlane.f32.xlu0 %v509
  %v541 = vpop.xlane.xlu0 %540
  %542 = vadd.xlane.f32.xlu0 %v511
  %v543 = vpop.xlane.xlu0 %542
  %544 = vadd.xlane.f32.xlu0 %v513
  %v545 = vpop.xlane.xlu0 %544
  %546 = vadd.xlane.f32.xlu0 %v515
  %v547 = vpop.xlane.xlu0 %546
  %548 = vadd.xlane.f32.xlu0 %v517
  %v549 = vpop.xlane.xlu0 %548
  %550 = vadd.xlane.f32.xlu0 %v519
  %v551 = vpop.xlane.xlu0 %550
  %552 = vadd.xlane.f32.xlu0 %v521
  %v553 = vpop.xlane.xlu0 %552
  %554 = vadd.xlane.f32.xlu0 %v523
  %v555 = vpop.xlane.xlu0 %554
  %556 = vadd.xlane.f32.xlu0 %v525
  %v557 = vpop.xlane.xlu0 %556
  %558 = vadd.xlane.f32.xlu0 %v527
  %v559 = vpop.xlane.xlu0 %558
  %560 = vadd.xlane.f32.xlu0 %v529
  %v561 = vpop.xlane.xlu0 %560
  %562 = vadd.xlane.f32.xlu0 %v531
  %v563 = vpop.xlane.xlu0 %562
  %564 = vadd.xlane.f32.xlu0 %v533
  %v565 = vpop.xlane.xlu0 %564
  %566 = vadd.xlane.f32.xlu0 %v535
  %v567 = vpop.xlane.xlu0 %566
  %568 = vadd.xlane.f32.xlu0 %v537
  %v569 = vpop.xlane.xlu0 %568
  %570 = vadd.xlane.f32.xlu0 %v539
  %v571 = vpop.xlane.xlu0 %570
  %v572 = vrcp.pop %v541
  %v573 = vrcp.pop %v543
  %v574 = vrcp.pop %v545
  %v575 = vrcp.pop %v547
  %v576 = vrcp.pop %v549
  %v577 = vrcp.pop %v551
  %v578 = vrcp.pop %v553
  %v579 = vrcp.pop %v555
  %v580 = vrcp.pop %v557
  %v581 = vrcp.pop %v559
  %v582 = vrcp.pop %v561
  %v583 = vrcp.pop %v563
  %v584 = vrcp.pop %v565
  %v585 = vrcp.pop %v567
  %v586 = vrcp.pop %v569
  %v587 = vrcp.pop %v571
  %v588 = vmul.f32 %v509, %v572
  %v589 = vmul.f32 %v511, %v573
  %v590 = vmul.f32 %v513, %v574
  %v591 = vmul.f32 %v515, %v575
  %v592 = vmul.f32 %v517, %v576
  %v593 = vmul.f32 %v519, %v577
  %v594 = vmul.f32 %v521, %v578
  %v595 = vmul.f32 %v523, %v579
  %v596 = vmul.f32 %v525, %v580
  %v597 = vmul.f32 %v527, %v581
  %v598 = vmul.f32 %v529, %v582
  %v599 = vmul.f32 %v531, %v583
  %v600 = vmul.f32 %v533, %v584
  %v601 = vmul.f32 %v535, %v585
  %v602 = vmul.f32 %v537, %v586
  %v603 = vmul.f32 %v539, %v587
  %v604 = vpack.c.bf16 %v589, %v588
  %v605 = vpack.c.bf16 %v591, %v590
  %v606 = vpack.c.bf16 %v593, %v592
  %v607 = vpack.c.bf16 %v595, %v594
  %v608 = vpack.c.bf16 %v597, %v596
  %v609 = vpack.c.bf16 %v599, %v598
  %v610 = vpack.c.bf16 %v601, %v600
  %v611 = vpack.c.bf16 %v603, %v602
  %v612 = vpack.c.bf16 %v149, %v147
  %v613 = vpack.c.bf16 %v154, %v152
  %v614 = vpack.c.bf16 %v159, %v157
  %v615 = vpack.c.bf16 %v164, %v162
  %v616 = vpack.c.bf16 %v169, %v167
  %v617 = vpack.c.bf16 %v174, %v172
  %v618 = vpack.c.bf16 %v179, %v177
  %v619 = vpack.c.bf16 %v184, %v182
  %v620 = vld [vmem:[%s3] sm:$0x1]
  %v621 = vperm.slane %v620, 0
  %622 = vmatpush.bf16.msra.mxu0 %v619
  %623 = vmatpush.bf16.msra.mxu0 %v618
  %624 = vmatpush.bf16.msra.mxu0 %v617
  %625 = vmatpush.bf16.msra.mxu0 %v616
  %626 = vmatpush.bf16.msra.mxu0 %v615
  %627 = vmatpush.bf16.msra.mxu0 %v614
  %628 = vmatpush.bf16.msra.mxu0 %v613
  %629 = vmatpush.bf16.msra.mxu0 %v612
  %630 = vmatmul.bf16.gmra.mxu0 %v604
  %v631 = vpop.f32.mrf.mxu0
  %v632 = vadd.f32 %v621, %v631
  %v633 = vpop.f32.mrf.mxu0
  %v634 = vadd.f32 %v621, %v633
  %635 = vmatmul.bf16.gmra.mxu0 %v605
  %v636 = vpop.f32.mrf.mxu0
  %v637 = vadd.f32 %v621, %v636
  %v638 = vpop.f32.mrf.mxu0
  %v639 = vadd.f32 %v621, %v638
  %640 = vmatmul.bf16.gmra.mxu0 %v606
  %v641 = vpop.f32.mrf.mxu0
  %v642 = vadd.f32 %v621, %v641
  %v643 = vpop.f32.mrf.mxu0
  %v644 = vadd.f32 %v621, %v643
  %645 = vmatmul.bf16.gmra.mxu0 %v607
  %v646 = vpop.f32.mrf.mxu0
  %v647 = vadd.f32 %v621, %v646
  %v648 = vpop.f32.mrf.mxu0
  %v649 = vadd.f32 %v621, %v648
  %650 = vmatmul.bf16.gmra.mxu0 %v608
  %v651 = vpop.f32.mrf.mxu0
  %v652 = vadd.f32 %v621, %v651
  %v653 = vpop.f32.mrf.mxu0
  %v654 = vadd.f32 %v621, %v653
  %655 = vmatmul.bf16.gmra.mxu0 %v609
  %v656 = vpop.f32.mrf.mxu0
  %v657 = vadd.f32 %v621, %v656
  %v658 = vpop.f32.mrf.mxu0
  %v659 = vadd.f32 %v621, %v658
  %660 = vmatmul.bf16.gmra.mxu0 %v610
  %v661 = vpop.f32.mrf.mxu0
  %v662 = vadd.f32 %v621, %v661
  %v663 = vpop.f32.mrf.mxu0
  %v664 = vadd.f32 %v621, %v663
  %665 = vmatmul.bf16.gmra.mxu0 %v611
  %v666 = vpop.f32.mrf.mxu0
  %v667 = vadd.f32 %v621, %v666
  %v668 = vpop.f32.mrf.mxu0
  %v669 = vadd.f32 %v621, %v668
  %670 = vdwg.mxu0
  %v671 = vmax.f32 %v632, 0.0
  %v672 = vmax.f32 %v634, 0.0
  %v673 = vmax.f32 %v637, 0.0
  %v674 = vmax.f32 %v639, 0.0
  %v675 = vmax.f32 %v642, 0.0
  %v676 = vmax.f32 %v644, 0.0
  %v677 = vmax.f32 %v647, 0.0
  %v678 = vmax.f32 %v649, 0.0
  %v679 = vmax.f32 %v652, 0.0
  %v680 = vmax.f32 %v654, 0.0
  %v681 = vmax.f32 %v657, 0.0
  %v682 = vmax.f32 %v659, 0.0
  %v683 = vmax.f32 %v662, 0.0
  %v684 = vmax.f32 %v664, 0.0
  %v685 = vmax.f32 %v667, 0.0
  %v686 = vmax.f32 %v669, 0.0
  %s687 = scalar_lea.vmem %s2, 128
  %v688 = vld [vmem:[%s687] sm:$0xff]
  %v689 = vld [vmem:[%s687 + $0x8] sm:$0xff]
  %v690 = vld [vmem:[%s687 + $0x10] sm:$0xff]
  %v691 = vld [vmem:[%s687 + $0x18] sm:$0xff]
  %v692 = vld [vmem:[%s687 + $0x20] sm:$0xff]
  %v693 = vld [vmem:[%s687 + $0x28] sm:$0xff]
  %v694 = vld [vmem:[%s687 + $0x30] sm:$0xff]
  %v695 = vld [vmem:[%s687 + $0x38] sm:$0xff]
  %v696 = vld [vmem:[%s687 + $0x40] sm:$0xff]
  %v697 = vld [vmem:[%s687 + $0x48] sm:$0xff]
  %v698 = vld [vmem:[%s687 + $0x50] sm:$0xff]
  %v699 = vld [vmem:[%s687 + $0x58] sm:$0xff]
  %v700 = vld [vmem:[%s687 + $0x60] sm:$0xff]
  %v701 = vld [vmem:[%s687 + $0x68] sm:$0xff]
  %v702 = vld [vmem:[%s687 + $0x70] sm:$0xff]
  %v703 = vld [vmem:[%s687 + $0x78] sm:$0xff]
  %v704 = vpack.c.bf16 %v672, %v671
  %v705 = vpack.c.bf16 %v674, %v673
  %v706 = vpack.c.bf16 %v676, %v675
  %v707 = vpack.c.bf16 %v678, %v677
  %v708 = vpack.c.bf16 %v680, %v679
  %v709 = vpack.c.bf16 %v682, %v681
  %v710 = vpack.c.bf16 %v684, %v683
  %v711 = vpack.c.bf16 %v686, %v685
  %v728 = vunpack.c.l.b16 %v688
  %v729 = vunpack.c.h.b16 %v688
  %v730 = vunpack.c.l.b16 %v689
  %v731 = vunpack.c.h.b16 %v689
  %v732 = vunpack.c.l.b16 %v690
  %v733 = vunpack.c.h.b16 %v690
  %v734 = vunpack.c.l.b16 %v691
  %v735 = vunpack.c.h.b16 %v691
  %v736 = vunpack.c.l.b16 %v692
  %v737 = vunpack.c.h.b16 %v692
  %v738 = vunpack.c.l.b16 %v693
  %v739 = vunpack.c.h.b16 %v693
  %v740 = vunpack.c.l.b16 %v694
  %v741 = vunpack.c.h.b16 %v694
  %v742 = vunpack.c.l.b16 %v695
  %v743 = vunpack.c.h.b16 %v695
  %v744 = vunpack.c.l.b16 %v696
  %v745 = vunpack.c.h.b16 %v696
  %v746 = vunpack.c.l.b16 %v697
  %v747 = vunpack.c.h.b16 %v697
  %v748 = vunpack.c.l.b16 %v698
  %v749 = vunpack.c.h.b16 %v698
  %v750 = vunpack.c.l.b16 %v699
  %v751 = vunpack.c.h.b16 %v699
  %v752 = vunpack.c.l.b16 %v700
  %v753 = vunpack.c.h.b16 %v700
  %v754 = vunpack.c.l.b16 %v701
  %v755 = vunpack.c.h.b16 %v701
  %v756 = vunpack.c.l.b16 %v702
  %v757 = vunpack.c.h.b16 %v702
  %v758 = vunpack.c.l.b16 %v703
  %v759 = vunpack.c.h.b16 %v703
  %v760 = vpack.c.b16 %v730, %v728
  %v761 = vpack.c.b16 %v731, %v729
  %v762 = vpack.c.b16 %v734, %v732
  %v763 = vpack.c.b16 %v735, %v733
  %v764 = vpack.c.b16 %v738, %v736
  %v765 = vpack.c.b16 %v739, %v737
  %v766 = vpack.c.b16 %v742, %v740
  %v767 = vpack.c.b16 %v743, %v741
  %v768 = vpack.c.b16 %v746, %v744
  %v769 = vpack.c.b16 %v747, %v745
  %v770 = vpack.c.b16 %v750, %v748
  %v771 = vpack.c.b16 %v751, %v749
  %v772 = vpack.c.b16 %v754, %v752
  %v773 = vpack.c.b16 %v755, %v753
  %v774 = vpack.c.b16 %v758, %v756
  %v775 = vpack.c.b16 %v759, %v757
  %792 = vmatpush.bf16.msra.mxu0 %v774
  %793 = vmatpush.bf16.msra.mxu0 %v772
  %794 = vmatpush.bf16.msra.mxu0 %v770
  %795 = vmatpush.bf16.msra.mxu0 %v768
  %796 = vmatpush.bf16.msra.mxu0 %v766
  %797 = vmatpush.bf16.msra.mxu0 %v764
  %798 = vmatpush.bf16.msra.mxu0 %v762
  %799 = vmatpush.bf16.msra.mxu0 %v760
  %800 = vmatmul.bf16.gmra.mxu0 %v704
  %v801 = vpop.f32.mrf.mxu0
  %v802 = vadd.f32 0.0, %v801
  %v803 = vpop.f32.mrf.mxu0
  %v804 = vadd.f32 0.0, %v803
  %805 = vmatmul.bf16.gmra.mxu0 %v705
  %v806 = vpop.f32.mrf.mxu0
  %v807 = vadd.f32 0.0, %v806
  %v808 = vpop.f32.mrf.mxu0
  %v809 = vadd.f32 0.0, %v808
  %810 = vmatmul.bf16.gmra.mxu0 %v706
  %v811 = vpop.f32.mrf.mxu0
  %v812 = vadd.f32 0.0, %v811
  %v813 = vpop.f32.mrf.mxu0
  %v814 = vadd.f32 0.0, %v813
  %815 = vmatmul.bf16.gmra.mxu0 %v707
  %v816 = vpop.f32.mrf.mxu0
  %v817 = vadd.f32 0.0, %v816
  %v818 = vpop.f32.mrf.mxu0
  %v819 = vadd.f32 0.0, %v818
  %820 = vmatmul.bf16.gmra.mxu0 %v708
  %v821 = vpop.f32.mrf.mxu0
  %v822 = vadd.f32 0.0, %v821
  %v823 = vpop.f32.mrf.mxu0
  %v824 = vadd.f32 0.0, %v823
  %825 = vmatmul.bf16.gmra.mxu0 %v709
  %v826 = vpop.f32.mrf.mxu0
  %v827 = vadd.f32 0.0, %v826
  %v828 = vpop.f32.mrf.mxu0
  %v829 = vadd.f32 0.0, %v828
  %830 = vmatmul.bf16.gmra.mxu0 %v710
  %v831 = vpop.f32.mrf.mxu0
  %v832 = vadd.f32 0.0, %v831
  %v833 = vpop.f32.mrf.mxu0
  %v834 = vadd.f32 0.0, %v833
  %835 = vmatmul.bf16.gmra.mxu0 %v711
  %v836 = vpop.f32.mrf.mxu0
  %v837 = vadd.f32 0.0, %v836
  %v838 = vpop.f32.mrf.mxu0
  %v839 = vadd.f32 0.0, %v838
  %840 = vdwg.mxu0
  %841 = vmatpush.bf16.msra.mxu0 %v775
  %842 = vmatpush.bf16.msra.mxu0 %v773
  %843 = vmatpush.bf16.msra.mxu0 %v771
  %844 = vmatpush.bf16.msra.mxu0 %v769
  %845 = vmatpush.bf16.msra.mxu0 %v767
  %846 = vmatpush.bf16.msra.mxu0 %v765
  %847 = vmatpush.bf16.msra.mxu0 %v763
  %848 = vmatpush.bf16.msra.mxu0 %v761
  %849 = vmatmul.bf16.gmra.mxu0 %v704
  %v850 = vpop.f32.mrf.mxu0
  %v851 = vadd.f32 0.0, %v850
  %v852 = vpop.f32.mrf.mxu0
  %v853 = vadd.f32 0.0, %v852
  %854 = vmatmul.bf16.gmra.mxu0 %v705
  %v855 = vpop.f32.mrf.mxu0
  %v856 = vadd.f32 0.0, %v855
  %v857 = vpop.f32.mrf.mxu0
  %v858 = vadd.f32 0.0, %v857
  %859 = vmatmul.bf16.gmra.mxu0 %v706
  %v860 = vpop.f32.mrf.mxu0
  %v861 = vadd.f32 0.0, %v860
  %v862 = vpop.f32.mrf.mxu0
  %v863 = vadd.f32 0.0, %v862
  %864 = vmatmul.bf16.gmra.mxu0 %v707
  %v865 = vpop.f32.mrf.mxu0
  %v866 = vadd.f32 0.0, %v865
  %v867 = vpop.f32.mrf.mxu0
  %v868 = vadd.f32 0.0, %v867
  %869 = vmatmul.bf16.gmra.mxu0 %v708
  %v870 = vpop.f32.mrf.mxu0
  %v871 = vadd.f32 0.0, %v870
  %v872 = vpop.f32.mrf.mxu0
  %v873 = vadd.f32 0.0, %v872
  %874 = vmatmul.bf16.gmra.mxu0 %v709
  %v875 = vpop.f32.mrf.mxu0
  %v876 = vadd.f32 0.0, %v875
  %v877 = vpop.f32.mrf.mxu0
  %v878 = vadd.f32 0.0, %v877
  %879 = vmatmul.bf16.gmra.mxu0 %v710
  %v880 = vpop.f32.mrf.mxu0
  %v881 = vadd.f32 0.0, %v880
  %v882 = vpop.f32.mrf.mxu0
  %v883 = vadd.f32 0.0, %v882
  %884 = vmatmul.bf16.gmra.mxu0 %v711
  %v885 = vpop.f32.mrf.mxu0
  %v886 = vadd.f32 0.0, %v885
  %v887 = vpop.f32.mrf.mxu0
  %v888 = vadd.f32 0.0, %v887
  %889 = vdwg.mxu0
  %890 = vxpose.xlu0.b32.start [1/16] %v851, 128
  %891 = vxpose.xlu0.b32.cont [2/16] %v853, 128
  %892 = vxpose.xlu0.b32.cont [3/16] %v856, 128
  %893 = vxpose.xlu0.b32.cont [4/16] %v858, 128
  %894 = vxpose.xlu0.b32.cont [5/16] %v861, 128
  %895 = vxpose.xlu0.b32.cont [6/16] %v863, 128
  %896 = vxpose.xlu0.b32.cont [7/16] %v866, 128
  %897 = vxpose.xlu0.b32.cont [8/16] %v868, 128
  %898 = vxpose.xlu0.b32.cont [9/16] %v871, 128
  %899 = vxpose.xlu0.b32.cont [10/16] %v873, 128
  %900 = vxpose.xlu0.b32.cont [11/16] %v876, 128
  %901 = vxpose.xlu0.b32.cont [12/16] %v878, 128
  %902 = vxpose.xlu0.b32.cont [13/16] %v881, 128
  %903 = vxpose.xlu0.b32.cont [14/16] %v883, 128
  %904 = vxpose.xlu0.b32.cont [15/16] %v886, 128
  %905 = vxpose.xlu0.b32.end [16/16] %v888, 128
  %v906 = vpop.trf.xlu0
  %v907 = vpop.trf.xlu0
  %v908 = vpop.trf.xlu0
  %v909 = vpop.trf.xlu0
  %v910 = vpop.trf.xlu0
  %v911 = vpop.trf.xlu0
  %v912 = vpop.trf.xlu0
  %v913 = vpop.trf.xlu0
  %v914 = vpop.trf.xlu0
  %v915 = vpop.trf.xlu0
  %v916 = vpop.trf.xlu0
  %v917 = vpop.trf.xlu0
  %v918 = vpop.trf.xlu0
  %v919 = vpop.trf.xlu0
  %v920 = vpop.trf.xlu0
  %v921 = vpop.trf.xlu0
  %923 = vset.pattern.permute.xlu0 1
  %924 = vperm.xlu0 %923, %v851
  %v925 = vpop.permute.xlu0 %924
  %928 = vset.pattern.permute.xlu0 1
  %929 = vperm.xlu0 %928, %v853
  %v930 = vpop.permute.xlu0 %929
  %933 = vset.pattern.permute.xlu0 1
  %934 = vperm.xlu0 %933, %v856
  %v935 = vpop.permute.xlu0 %934
  %938 = vset.pattern.permute.xlu0 1
  %939 = vperm.xlu0 %938, %v858
  %v940 = vpop.permute.xlu0 %939
  %943 = vset.pattern.permute.xlu0 1
  %944 = vperm.xlu0 %943, %v861
  %v945 = vpop.permute.xlu0 %944
  %948 = vset.pattern.permute.xlu0 1
  %949 = vperm.xlu0 %948, %v863
  %v950 = vpop.permute.xlu0 %949
  %953 = vset.pattern.permute.xlu0 1
  %954 = vperm.xlu0 %953, %v866
  %v955 = vpop.permute.xlu0 %954
  %958 = vset.pattern.permute.xlu0 1
  %959 = vperm.xlu0 %958, %v868
  %v960 = vpop.permute.xlu0 %959
  %963 = vset.pattern.permute.xlu0 1
  %964 = vperm.xlu0 %963, %v871
  %v965 = vpop.permute.xlu0 %964
  %968 = vset.pattern.permute.xlu0 1
  %969 = vperm.xlu0 %968, %v873
  %v970 = vpop.permute.xlu0 %969
  %973 = vset.pattern.permute.xlu0 1
  %974 = vperm.xlu0 %973, %v876
  %v975 = vpop.permute.xlu0 %974
  %978 = vset.pattern.permute.xlu0 1
  %979 = vperm.xlu0 %978, %v878
  %v980 = vpop.permute.xlu0 %979
  %983 = vset.pattern.permute.xlu0 1
  %984 = vperm.xlu0 %983, %v881
  %v985 = vpop.permute.xlu0 %984
  %988 = vset.pattern.permute.xlu0 1
  %989 = vperm.xlu0 %988, %v883
  %v990 = vpop.permute.xlu0 %989
  %993 = vset.pattern.permute.xlu0 1
  %994 = vperm.xlu0 %993, %v886
  %v995 = vpop.permute.xlu0 %994
  %998 = vset.pattern.permute.xlu0 1
  %999 = vperm.xlu0 %998, %v888
  %v1000 = vpop.permute.xlu0 %999
  %v1002 = vperm.slane %v906, 0
  %v1003 = vadd.f32 %v925, %v1002
  %v1004 = vadd.f32 %v930, %v1002
  %v1005 = vadd.f32 %v935, %v1002
  %v1006 = vadd.f32 %v940, %v1002
  %v1007 = vadd.f32 %v945, %v1002
  %v1008 = vadd.f32 %v950, %v1002
  %v1009 = vadd.f32 %v955, %v1002
  %v1010 = vadd.f32 %v960, %v1002
  %v1011 = vadd.f32 %v965, %v1002
  %v1012 = vadd.f32 %v970, %v1002
  %v1013 = vadd.f32 %v975, %v1002
  %v1014 = vadd.f32 %v980, %v1002
  %v1015 = vadd.f32 %v985, %v1002
  %v1016 = vadd.f32 %v990, %v1002
  %v1017 = vadd.f32 %v995, %v1002
  %v1018 = vadd.f32 %v1000, %v1002
  %vm1019 = vcmp.gt.f32.partialorder %v1003, 0.0
  %vm1020 = vcmp.gt.f32.partialorder %v1004, 0.0
  %vm1021 = vcmp.gt.f32.partialorder %v1005, 0.0
  %vm1022 = vcmp.gt.f32.partialorder %v1006, 0.0
  %vm1023 = vcmp.gt.f32.partialorder %v1007, 0.0
  %vm1024 = vcmp.gt.f32.partialorder %v1008, 0.0
  %vm1025 = vcmp.gt.f32.partialorder %v1009, 0.0
  %vm1026 = vcmp.gt.f32.partialorder %v1010, 0.0
  %vm1027 = vcmp.gt.f32.partialorder %v1011, 0.0
  %vm1028 = vcmp.gt.f32.partialorder %v1012, 0.0
  %vm1029 = vcmp.gt.f32.partialorder %v1013, 0.0
  %vm1030 = vcmp.gt.f32.partialorder %v1014, 0.0
  %vm1031 = vcmp.gt.f32.partialorder %v1015, 0.0
  %vm1032 = vcmp.gt.f32.partialorder %v1016, 0.0
  %vm1033 = vcmp.gt.f32.partialorder %v1017, 0.0
  %vm1034 = vcmp.gt.f32.partialorder %v1018, 0.0
  %v1035 = vmul.f32 %v1003, 0.2
  %v1036 = vmul.f32 %v1004, 0.2
  %v1037 = vmul.f32 %v1005, 0.2
  %v1038 = vmul.f32 %v1006, 0.2
  %v1039 = vmul.f32 %v1007, 0.2
  %v1040 = vmul.f32 %v1008, 0.2
  %v1041 = vmul.f32 %v1009, 0.2
  %v1042 = vmul.f32 %v1010, 0.2
  %v1043 = vmul.f32 %v1011, 0.2
  %v1044 = vmul.f32 %v1012, 0.2
  %v1045 = vmul.f32 %v1013, 0.2
  %v1046 = vmul.f32 %v1014, 0.2
  %v1047 = vmul.f32 %v1015, 0.2
  %v1048 = vmul.f32 %v1016, 0.2
  %v1049 = vmul.f32 %v1017, 0.2
  %v1050 = vmul.f32 %v1018, 0.2
  %v1051 = vsel %vm1019, %v1003, %v1035
  %v1052 = vsel %vm1020, %v1004, %v1036
  %v1053 = vsel %vm1021, %v1005, %v1037
  %v1054 = vsel %vm1022, %v1006, %v1038
  %v1055 = vsel %vm1023, %v1007, %v1039
  %v1056 = vsel %vm1024, %v1008, %v1040
  %v1057 = vsel %vm1025, %v1009, %v1041
  %v1058 = vsel %vm1026, %v1010, %v1042
  %v1059 = vsel %vm1027, %v1011, %v1043
  %v1060 = vsel %vm1028, %v1012, %v1044
  %v1061 = vsel %vm1029, %v1013, %v1045
  %v1062 = vsel %vm1030, %v1014, %v1046
  %v1063 = vsel %vm1031, %v1015, %v1047
  %v1064 = vsel %vm1032, %v1016, %v1048
  %v1065 = vsel %vm1033, %v1017, %v1049
  %v1066 = vsel %vm1034, %v1018, %v1050
  %v1067 = vadd.f32 %v1051, %v428
  %v1068 = vadd.f32 %v1052, %v429
  %v1069 = vadd.f32 %v1053, %v430
  %v1070 = vadd.f32 %v1054, %v431
  %v1071 = vadd.f32 %v1055, %v432
  %v1072 = vadd.f32 %v1056, %v433
  %v1073 = vadd.f32 %v1057, %v434
  %v1074 = vadd.f32 %v1058, %v435
  %v1075 = vadd.f32 %v1059, %v436
  %v1076 = vadd.f32 %v1060, %v437
  %v1077 = vadd.f32 %v1061, %v438
  %v1078 = vadd.f32 %v1062, %v439
  %v1079 = vadd.f32 %v1063, %v440
  %v1080 = vadd.f32 %v1064, %v441
  %v1081 = vadd.f32 %v1065, %v442
  %v1082 = vadd.f32 %v1066, %v443
  %1083 = vmax.xlane.f32.xlu0 %v1067
  %v1084 = vpop.xlane.xlu0 %1083
  %1085 = vmax.xlane.f32.xlu0 %v1068
  %v1086 = vpop.xlane.xlu0 %1085
  %1087 = vmax.xlane.f32.xlu0 %v1069
  %v1088 = vpop.xlane.xlu0 %1087
  %1089 = vmax.xlane.f32.xlu0 %v1070
  %v1090 = vpop.xlane.xlu0 %1089
  %1091 = vmax.xlane.f32.xlu0 %v1071
  %v1092 = vpop.xlane.xlu0 %1091
  %1093 = vmax.xlane.f32.xlu0 %v1072
  %v1094 = vpop.xlane.xlu0 %1093
  %1095 = vmax.xlane.f32.xlu0 %v1073
  %v1096 = vpop.xlane.xlu0 %1095
  %1097 = vmax.xlane.f32.xlu0 %v1074
  %v1098 = vpop.xlane.xlu0 %1097
  %1099 = vmax.xlane.f32.xlu0 %v1075
  %v1100 = vpop.xlane.xlu0 %1099
  %1101 = vmax.xlane.f32.xlu0 %v1076
  %v1102 = vpop.xlane.xlu0 %1101
  %1103 = vmax.xlane.f32.xlu0 %v1077
  %v1104 = vpop.xlane.xlu0 %1103
  %1105 = vmax.xlane.f32.xlu0 %v1078
  %v1106 = vpop.xlane.xlu0 %1105
  %1107 = vmax.xlane.f32.xlu0 %v1079
  %v1108 = vpop.xlane.xlu0 %1107
  %1109 = vmax.xlane.f32.xlu0 %v1080
  %v1110 = vpop.xlane.xlu0 %1109
  %1111 = vmax.xlane.f32.xlu0 %v1081
  %v1112 = vpop.xlane.xlu0 %1111
  %1113 = vmax.xlane.f32.xlu0 %v1082
  %v1114 = vpop.xlane.xlu0 %1113
  %v1115 = vsub.f32 %v1067, %v1084
  %v1116 = vsub.f32 %v1068, %v1086
  %v1117 = vsub.f32 %v1069, %v1088
  %v1118 = vsub.f32 %v1070, %v1090
  %v1119 = vsub.f32 %v1071, %v1092
  %v1120 = vsub.f32 %v1072, %v1094
  %v1121 = vsub.f32 %v1073, %v1096
  %v1122 = vsub.f32 %v1074, %v1098
  %v1123 = vsub.f32 %v1075, %v1100
  %v1124 = vsub.f32 %v1076, %v1102
  %v1125 = vsub.f32 %v1077, %v1104
  %v1126 = vsub.f32 %v1078, %v1106
  %v1127 = vsub.f32 %v1079, %v1108
  %v1128 = vsub.f32 %v1080, %v1110
  %v1129 = vsub.f32 %v1081, %v1112
  %v1130 = vsub.f32 %v1082, %v1114
  %v1131 = vmul.f32 %v1115, 1.442695
  %v1132 = vpow.pop %v1131
  %v1133 = vmul.f32 %v1116, 1.442695
  %v1134 = vpow.pop %v1133
  %v1135 = vmul.f32 %v1117, 1.442695
  %v1136 = vpow.pop %v1135
  %v1137 = vmul.f32 %v1118, 1.442695
  %v1138 = vpow.pop %v1137
  %v1139 = vmul.f32 %v1119, 1.442695
  %v1140 = vpow.pop %v1139
  %v1141 = vmul.f32 %v1120, 1.442695
  %v1142 = vpow.pop %v1141
  %v1143 = vmul.f32 %v1121, 1.442695
  %v1144 = vpow.pop %v1143
  %v1145 = vmul.f32 %v1122, 1.442695
  %v1146 = vpow.pop %v1145
  %v1147 = vmul.f32 %v1123, 1.442695
  %v1148 = vpow.pop %v1147
  %v1149 = vmul.f32 %v1124, 1.442695
  %v1150 = vpow.pop %v1149
  %v1151 = vmul.f32 %v1125, 1.442695
  %v1152 = vpow.pop %v1151
  %v1153 = vmul.f32 %v1126, 1.442695
  %v1154 = vpow.pop %v1153
  %v1155 = vmul.f32 %v1127, 1.442695
  %v1156 = vpow.pop %v1155
  %v1157 = vmul.f32 %v1128, 1.442695
  %v1158 = vpow.pop %v1157
  %v1159 = vmul.f32 %v1129, 1.442695
  %v1160 = vpow.pop %v1159
  %v1161 = vmul.f32 %v1130, 1.442695
  %v1162 = vpow.pop %v1161
  %1163 = vadd.xlane.f32.xlu0 %v1132
  %v1164 = vpop.xlane.xlu0 %1163
  %1165 = vadd.xlane.f32.xlu0 %v1134
  %v1166 = vpop.xlane.xlu0 %1165
  %1167 = vadd.xlane.f32.xlu0 %v1136
  %v1168 = vpop.xlane.xlu0 %1167
  %1169 = vadd.xlane.f32.xlu0 %v1138
  %v1170 = vpop.xlane.xlu0 %1169
  %1171 = vadd.xlane.f32.xlu0 %v1140
  %v1172 = vpop.xlane.xlu0 %1171
  %1173 = vadd.xlane.f32.xlu0 %v1142
  %v1174 = vpop.xlane.xlu0 %1173
  %1175 = vadd.xlane.f32.xlu0 %v1144
  %v1176 = vpop.xlane.xlu0 %1175
  %1177 = vadd.xlane.f32.xlu0 %v1146
  %v1178 = vpop.xlane.xlu0 %1177
  %1179 = vadd.xlane.f32.xlu0 %v1148
  %v1180 = vpop.xlane.xlu0 %1179
  %1181 = vadd.xlane.f32.xlu0 %v1150
  %v1182 = vpop.xlane.xlu0 %1181
  %1183 = vadd.xlane.f32.xlu0 %v1152
  %v1184 = vpop.xlane.xlu0 %1183
  %1185 = vadd.xlane.f32.xlu0 %v1154
  %v1186 = vpop.xlane.xlu0 %1185
  %1187 = vadd.xlane.f32.xlu0 %v1156
  %v1188 = vpop.xlane.xlu0 %1187
  %1189 = vadd.xlane.f32.xlu0 %v1158
  %v1190 = vpop.xlane.xlu0 %1189
  %1191 = vadd.xlane.f32.xlu0 %v1160
  %v1192 = vpop.xlane.xlu0 %1191
  %1193 = vadd.xlane.f32.xlu0 %v1162
  %v1194 = vpop.xlane.xlu0 %1193
  %v1195 = vrcp.pop %v1164
  %v1196 = vrcp.pop %v1166
  %v1197 = vrcp.pop %v1168
  %v1198 = vrcp.pop %v1170
  %v1199 = vrcp.pop %v1172
  %v1200 = vrcp.pop %v1174
  %v1201 = vrcp.pop %v1176
  %v1202 = vrcp.pop %v1178
  %v1203 = vrcp.pop %v1180
  %v1204 = vrcp.pop %v1182
  %v1205 = vrcp.pop %v1184
  %v1206 = vrcp.pop %v1186
  %v1207 = vrcp.pop %v1188
  %v1208 = vrcp.pop %v1190
  %v1209 = vrcp.pop %v1192
  %v1210 = vrcp.pop %v1194
  %v1211 = vmul.f32 %v1132, %v1195
  %v1212 = vmul.f32 %v1134, %v1196
  %v1213 = vmul.f32 %v1136, %v1197
  %v1214 = vmul.f32 %v1138, %v1198
  %v1215 = vmul.f32 %v1140, %v1199
  %v1216 = vmul.f32 %v1142, %v1200
  %v1217 = vmul.f32 %v1144, %v1201
  %v1218 = vmul.f32 %v1146, %v1202
  %v1219 = vmul.f32 %v1148, %v1203
  %v1220 = vmul.f32 %v1150, %v1204
  %v1221 = vmul.f32 %v1152, %v1205
  %v1222 = vmul.f32 %v1154, %v1206
  %v1223 = vmul.f32 %v1156, %v1207
  %v1224 = vmul.f32 %v1158, %v1208
  %v1225 = vmul.f32 %v1160, %v1209
  %v1226 = vmul.f32 %v1162, %v1210
  %v1227 = vpack.c.bf16 %v1212, %v1211
  %v1228 = vpack.c.bf16 %v1214, %v1213
  %v1229 = vpack.c.bf16 %v1216, %v1215
  %v1230 = vpack.c.bf16 %v1218, %v1217
  %v1231 = vpack.c.bf16 %v1220, %v1219
  %v1232 = vpack.c.bf16 %v1222, %v1221
  %v1233 = vpack.c.bf16 %v1224, %v1223
  %v1234 = vpack.c.bf16 %v1226, %v1225
  %v1235 = vpack.c.bf16 %v804, %v802
  %v1236 = vpack.c.bf16 %v809, %v807
  %v1237 = vpack.c.bf16 %v814, %v812
  %v1238 = vpack.c.bf16 %v819, %v817
  %v1239 = vpack.c.bf16 %v824, %v822
  %v1240 = vpack.c.bf16 %v829, %v827
  %v1241 = vpack.c.bf16 %v834, %v832
  %v1242 = vpack.c.bf16 %v839, %v837
  %v1243 = vld [vmem:[%s3 + $0x1] sm:$0x1]
  %v1244 = vperm.slane %v1243, 0
  %1245 = vmatpush.bf16.msra.mxu0 %v1242
  %1246 = vmatpush.bf16.msra.mxu0 %v1241
  %1247 = vmatpush.bf16.msra.mxu0 %v1240
  %1248 = vmatpush.bf16.msra.mxu0 %v1239
  %1249 = vmatpush.bf16.msra.mxu0 %v1238
  %1250 = vmatpush.bf16.msra.mxu0 %v1237
  %1251 = vmatpush.bf16.msra.mxu0 %v1236
  %1252 = vmatpush.bf16.msra.mxu0 %v1235
  %1253 = vmatmul.bf16.gmra.mxu0 %v1227
  %v1254 = vpop.f32.mrf.mxu0
  %v1255 = vadd.f32 %v1244, %v1254
  %v1256 = vpop.f32.mrf.mxu0
  %v1257 = vadd.f32 %v1244, %v1256
  %1258 = vmatmul.bf16.gmra.mxu0 %v1228
  %v1259 = vpop.f32.mrf.mxu0
  %v1260 = vadd.f32 %v1244, %v1259
  %v1261 = vpop.f32.mrf.mxu0
  %v1262 = vadd.f32 %v1244, %v1261
  %1263 = vmatmul.bf16.gmra.mxu0 %v1229
  %v1264 = vpop.f32.mrf.mxu0
  %v1265 = vadd.f32 %v1244, %v1264
  %v1266 = vpop.f32.mrf.mxu0
  %v1267 = vadd.f32 %v1244, %v1266
  %1268 = vmatmul.bf16.gmra.mxu0 %v1230
  %v1269 = vpop.f32.mrf.mxu0
  %v1270 = vadd.f32 %v1244, %v1269
  %v1271 = vpop.f32.mrf.mxu0
  %v1272 = vadd.f32 %v1244, %v1271
  %1273 = vmatmul.bf16.gmra.mxu0 %v1231
  %v1274 = vpop.f32.mrf.mxu0
  %v1275 = vadd.f32 %v1244, %v1274
  %v1276 = vpop.f32.mrf.mxu0
  %v1277 = vadd.f32 %v1244, %v1276
  %1278 = vmatmul.bf16.gmra.mxu0 %v1232
  %v1279 = vpop.f32.mrf.mxu0
  %v1280 = vadd.f32 %v1244, %v1279
  %v1281 = vpop.f32.mrf.mxu0
  %v1282 = vadd.f32 %v1244, %v1281
  %1283 = vmatmul.bf16.gmra.mxu0 %v1233
  %v1284 = vpop.f32.mrf.mxu0
  %v1285 = vadd.f32 %v1244, %v1284
  %v1286 = vpop.f32.mrf.mxu0
  %v1287 = vadd.f32 %v1244, %v1286
  %1288 = vmatmul.bf16.gmra.mxu0 %v1234
  %v1289 = vpop.f32.mrf.mxu0
  %v1290 = vadd.f32 %v1244, %v1289
  %v1291 = vpop.f32.mrf.mxu0
  %v1292 = vadd.f32 %v1244, %v1291
  %1293 = vdwg.mxu0
  %v1294 = vmax.f32 %v1255, 0.0
  %v1295 = vmax.f32 %v1257, 0.0
  %v1296 = vmax.f32 %v1260, 0.0
  %v1297 = vmax.f32 %v1262, 0.0
  %v1298 = vmax.f32 %v1265, 0.0
  %v1299 = vmax.f32 %v1267, 0.0
  %v1300 = vmax.f32 %v1270, 0.0
  %v1301 = vmax.f32 %v1272, 0.0
  %v1302 = vmax.f32 %v1275, 0.0
  %v1303 = vmax.f32 %v1277, 0.0
  %v1304 = vmax.f32 %v1280, 0.0
  %v1305 = vmax.f32 %v1282, 0.0
  %v1306 = vmax.f32 %v1285, 0.0
  %v1307 = vmax.f32 %v1287, 0.0
  %v1308 = vmax.f32 %v1290, 0.0
  %v1309 = vmax.f32 %v1292, 0.0
  %s1310 = scalar_lea.vmem %s2, 256
  %v1311 = vld [vmem:[%s1310] sm:$0xff]
  %v1312 = vld [vmem:[%s1310 + $0x8] sm:$0xff]
  %v1313 = vld [vmem:[%s1310 + $0x10] sm:$0xff]
  %v1314 = vld [vmem:[%s1310 + $0x18] sm:$0xff]
  %v1315 = vld [vmem:[%s1310 + $0x20] sm:$0xff]
  %v1316 = vld [vmem:[%s1310 + $0x28] sm:$0xff]
  %v1317 = vld [vmem:[%s1310 + $0x30] sm:$0xff]
  %v1318 = vld [vmem:[%s1310 + $0x38] sm:$0xff]
  %v1319 = vld [vmem:[%s1310 + $0x40] sm:$0xff]
  %v1320 = vld [vmem:[%s1310 + $0x48] sm:$0xff]
  %v1321 = vld [vmem:[%s1310 + $0x50] sm:$0xff]
  %v1322 = vld [vmem:[%s1310 + $0x58] sm:$0xff]
  %v1323 = vld [vmem:[%s1310 + $0x60] sm:$0xff]
  %v1324 = vld [vmem:[%s1310 + $0x68] sm:$0xff]
  %v1325 = vld [vmem:[%s1310 + $0x70] sm:$0xff]
  %v1326 = vld [vmem:[%s1310 + $0x78] sm:$0xff]
  %v1327 = vpack.c.bf16 %v1295, %v1294
  %v1328 = vpack.c.bf16 %v1297, %v1296
  %v1329 = vpack.c.bf16 %v1299, %v1298
  %v1330 = vpack.c.bf16 %v1301, %v1300
  %v1331 = vpack.c.bf16 %v1303, %v1302
  %v1332 = vpack.c.bf16 %v1305, %v1304
  %v1333 = vpack.c.bf16 %v1307, %v1306
  %v1334 = vpack.c.bf16 %v1309, %v1308
  %v1335 = vld [vmem:[%s3 + $0x2] sm:$0x1]
  %v1336 = vperm.slane %v1335, 0
  %v1353 = vunpack.c.l.b16 %v1311
  %v1354 = vunpack.c.l.b16 %v1312
  %v1355 = vunpack.c.l.b16 %v1313
  %v1356 = vunpack.c.l.b16 %v1314
  %v1357 = vunpack.c.l.b16 %v1315
  %v1358 = vunpack.c.l.b16 %v1316
  %v1359 = vunpack.c.l.b16 %v1317
  %v1360 = vunpack.c.l.b16 %v1318
  %v1361 = vunpack.c.l.b16 %v1319
  %v1362 = vunpack.c.l.b16 %v1320
  %v1363 = vunpack.c.l.b16 %v1321
  %v1364 = vunpack.c.l.b16 %v1322
  %v1365 = vunpack.c.l.b16 %v1323
  %v1366 = vunpack.c.l.b16 %v1324
  %v1367 = vunpack.c.l.b16 %v1325
  %v1368 = vunpack.c.l.b16 %v1326
  %v1369 = vpack.c.b16 %v1354, %v1353
  %v1370 = vpack.c.b16 %v1356, %v1355
  %v1371 = vpack.c.b16 %v1358, %v1357
  %v1372 = vpack.c.b16 %v1360, %v1359
  %v1373 = vpack.c.b16 %v1362, %v1361
  %v1374 = vpack.c.b16 %v1364, %v1363
  %v1375 = vpack.c.b16 %v1366, %v1365
  %v1376 = vpack.c.b16 %v1368, %v1367
  %1385 = vmatpush.bf16.msra.mxu0 %v1376
  %1386 = vmatpush.bf16.msra.mxu0 %v1375
  %1387 = vmatpush.bf16.msra.mxu0 %v1374
  %1388 = vmatpush.bf16.msra.mxu0 %v1373
  %1389 = vmatpush.bf16.msra.mxu0 %v1372
  %1390 = vmatpush.bf16.msra.mxu0 %v1371
  %1391 = vmatpush.bf16.msra.mxu0 %v1370
  %1392 = vmatpush.bf16.msra.mxu0 %v1369
  %1393 = vmatmul.bf16.gmra.mxu0 %v1327
  %v1394 = vpop.f32.mrf.mxu0
  %v1395 = vadd.f32 %v1336, %v1394
  %v1396 = vpop.f32.mrf.mxu0
  %v1397 = vadd.f32 %v1336, %v1396
  %1398 = vmatmul.bf16.gmra.mxu0 %v1328
  %v1399 = vpop.f32.mrf.mxu0
  %v1400 = vadd.f32 %v1336, %v1399
  %v1401 = vpop.f32.mrf.mxu0
  %v1402 = vadd.f32 %v1336, %v1401
  %1403 = vmatmul.bf16.gmra.mxu0 %v1329
  %v1404 = vpop.f32.mrf.mxu0
  %v1405 = vadd.f32 %v1336, %v1404
  %v1406 = vpop.f32.mrf.mxu0
  %v1407 = vadd.f32 %v1336, %v1406
  %1408 = vmatmul.bf16.gmra.mxu0 %v1330
  %v1409 = vpop.f32.mrf.mxu0
  %v1410 = vadd.f32 %v1336, %v1409
  %v1411 = vpop.f32.mrf.mxu0
  %v1412 = vadd.f32 %v1336, %v1411
  %1413 = vmatmul.bf16.gmra.mxu0 %v1331
  %v1414 = vpop.f32.mrf.mxu0
  %v1415 = vadd.f32 %v1336, %v1414
  %v1416 = vpop.f32.mrf.mxu0
  %v1417 = vadd.f32 %v1336, %v1416
  %1418 = vmatmul.bf16.gmra.mxu0 %v1332
  %v1419 = vpop.f32.mrf.mxu0
  %v1420 = vadd.f32 %v1336, %v1419
  %v1421 = vpop.f32.mrf.mxu0
  %v1422 = vadd.f32 %v1336, %v1421
  %1423 = vmatmul.bf16.gmra.mxu0 %v1333
  %v1424 = vpop.f32.mrf.mxu0
  %v1425 = vadd.f32 %v1336, %v1424
  %v1426 = vpop.f32.mrf.mxu0
  %v1427 = vadd.f32 %v1336, %v1426
  %1428 = vmatmul.bf16.gmra.mxu0 %v1334
  %v1429 = vpop.f32.mrf.mxu0
  %v1430 = vadd.f32 %v1336, %v1429
  %v1431 = vpop.f32.mrf.mxu0
  %v1432 = vadd.f32 %v1336, %v1431
  %1433 = vdwg.mxu0
  %1434 = vst [vmem:[%s4] sm:$0xff] %v1395
  %1435 = vst [vmem:[%s4 + $0x8] sm:$0xff] %v1397
  %1436 = vst [vmem:[%s4 + $0x10] sm:$0xff] %v1400
  %1437 = vst [vmem:[%s4 + $0x18] sm:$0xff] %v1402
  %1438 = vst [vmem:[%s4 + $0x20] sm:$0xff] %v1405
  %1439 = vst [vmem:[%s4 + $0x28] sm:$0xff] %v1407
  %1440 = vst [vmem:[%s4 + $0x30] sm:$0xff] %v1410
  %1441 = vst [vmem:[%s4 + $0x38] sm:$0xff] %v1412
  %1442 = vst [vmem:[%s4 + $0x40] sm:$0xff] %v1415
  %1443 = vst [vmem:[%s4 + $0x48] sm:$0xff] %v1417
  %1444 = vst [vmem:[%s4 + $0x50] sm:$0xff] %v1420
  %1445 = vst [vmem:[%s4 + $0x58] sm:$0xff] %v1422
  %1446 = vst [vmem:[%s4 + $0x60] sm:$0xff] %v1425
  %1447 = vst [vmem:[%s4 + $0x68] sm:$0xff] %v1427
  %1448 = vst [vmem:[%s4 + $0x70] sm:$0xff] %v1430
  %1449 = vst [vmem:[%s4 + $0x78] sm:$0xff] %v1432
  // Predicated region
  $region18: #{gat_forward.1} parent=0 // pred_check
    _
  $region19: #{gat_forward.1} parent=0 // pred_check_branch
    %1451 = sbr.rel (0) target = $region21
  $region20: #{gat_forward.1} parent=0 // pred_region
    _
  $region21: #{gat_forward.1} parent=0 // pred_fallthru
    _
  // Predicated region
  $region22: #{gat_forward.1} parent=0 // pred_check
    _
  $region23: #{gat_forward.1} parent=0 // pred_check_branch
    %1453 = sbr.rel (0) target = $region25
  $region24: #{gat_forward.1} parent=0 // pred_region
    _
  $region25: #{gat_forward.1} parent=0 // pred_fallthru
    _

</llo_original>
